<compile_context>
chip_gen: v6e
topology: v6e:2x2x1
jax: 0.10.0
libtpu: 0.0.40
codegen_flags: <defaults>
</compile_context>

<pallas_src>
import jax
import jax.numpy as jnp
from jax.experimental import pallas as pl
from jax.experimental.pallas import tpu as pltpu


TILE_B = 1024     # batch tile; multiple of 256 (MXU rows), amortizes grid-step overhead


def _round_up(x, m):
    return (x + m - 1) // m * m


def mlp_kernel(x_ref, w1_ref, b1_ref, w2_ref, b2_ref, w3_ref, b3_ref, o_ref):
    """Fused 3-layer MLP for one batch tile.

    x arrives f32 (straight from HBM) and is cast to bf16 on the VPU (free filler
    under the MXU/DMA).  Matmuls are bf16 operands with f32 accumulation; bias-add
    and ReLU stay f32.  The final 256->1 layer runs on the VPU+XLU.
    """
    x = x_ref[...].astype(jnp.bfloat16)                                   # [TB, D] bf16
    # Layer 1: Linear(256 -> 256) + ReLU
    h1 = jnp.dot(x, w1_ref[...], preferred_element_type=jnp.float32) + b1_ref[...]
    h1 = jnp.maximum(h1, 0.0).astype(jnp.bfloat16)
    # Layer 2: Linear(256 -> 256) + ReLU (keep f32 for the VPU layer-3)
    h2 = jnp.dot(h1, w2_ref[...], preferred_element_type=jnp.float32) + b2_ref[...]
    h2 = jnp.maximum(h2, 0.0)                                             # [TB, H] f32
    # Layer 3: Linear(256 -> 1) as multiply + cross-lane reduce (no padded MXU matmul)
    out = jnp.sum(h2 * w3_ref[...], axis=-1, keepdims=True) + b3_ref[...]
    o_ref[...] = out.astype(o_ref.dtype)                                  # [TB, 1] f32


def _choose_tile_b(B, tile_b=TILE_B):
    tb = min(tile_b, _round_up(B, 8))
    if B >= 512:
        # keep at least 2 grid steps so both v7x TensorCores get work
        tb = min(tb, max(256, _round_up((B + 1) // 2, 256)))
    return tb


def baseline_forward(x, params, tile_b=TILE_B):
    """x: [B, input_dim] float32. params: dict of f32 weights/biases. Returns [B, 1] f32."""
    B, D = x.shape
    H = params["w1"].shape[1]

    # bf16 operands for the MXU matmuls; biases and the tiny last layer stay f32.
    w1 = params["w1"].astype(jnp.bfloat16)
    w2 = params["w2"].astype(jnp.bfloat16)
    b1 = params["b1"].astype(jnp.float32).reshape(1, H)
    b2 = params["b2"].astype(jnp.float32).reshape(1, H)
    w3 = params["w3"].astype(jnp.float32).reshape(H, 1).T                 # [1, H]
    b3 = params["b3"].astype(jnp.float32).reshape(1, 1)

    tb = _choose_tile_b(B, tile_b)
    grid = (pl.cdiv(B, tb),)   # ragged edge block handled by Pallas (rows independent)

    resident = lambda shape: pl.BlockSpec(shape, lambda i: (0, 0))   # stays in VMEM

    out = pl.pallas_call(
        mlp_kernel,
        out_shape=jax.ShapeDtypeStruct((B, 1), jnp.float32),
        grid=grid,
        in_specs=[
            pl.BlockSpec((tb, D), lambda i: (i, 0)),   # x: streamed f32, double-buffered
            resident((D, H)),                          # w1 (bf16)
            resident((1, H)),                          # b1 (f32)
            resident((H, H)),                          # w2 (bf16)
            resident((1, H)),                          # b2 (f32)
            resident((1, H)),                          # w3 row (f32, unpadded)
            resident((1, 1)),                          # b3 (f32)
        ],
        out_specs=pl.BlockSpec((tb, 1), lambda i: (i, 0)),
        compiler_params=pltpu.CompilerParams(
            dimension_semantics=("parallel",),          # megacore sharding on v7x
            vmem_limit_bytes=32 * 1024 * 1024,          # plenty at this tile on all gens
        ),
    )(x.astype(jnp.float32), w1, b1, w2, b2, w3, b3)

    return out


def xavier_uniform(key, fan_in, fan_out, dtype=jnp.float32):
    # Matches torch.nn.init.xavier_uniform_ (gain=1): U(-a, a), a = sqrt(6/(fan_in+fan_out))
    a = jnp.sqrt(6.0 / (fan_in + fan_out))
    return jax.random.uniform(key, (fan_in, fan_out), dtype=dtype, minval=-a, maxval=a)


def init_params(key, input_dim=256, hidden=(256, 256, 1)):
    k1, k2, k3 = jax.random.split(key, 3)
    h0, h1, h2 = hidden
    return {
        # stored as [in, out] (transpose of PyTorch's [out, in]); xavier_uniform is
        # symmetric in (fan_in, fan_out) so the init distribution matches exactly.
        "w1": xavier_uniform(k1, input_dim, h0),
        "b1": jnp.full((1, h0), 0.01, jnp.float32),   # bias.data.fill_(0.01)
        "w2": xavier_uniform(k2, h0, h1),
        "b2": jnp.full((1, h1), 0.01, jnp.float32),
        "w3": xavier_uniform(k3, h1, h2),
        "b3": jnp.full((1, h2), 0.01, jnp.float32),
    }


def reference_forward_bf16(x, params):
    """JAX reference with the same bf16-operand / f32-accumulate recipe as the kernel."""
    xb = x.astype(jnp.bfloat16)
    w1 = params["w1"].astype(jnp.bfloat16)
    w2 = params["w2"].astype(jnp.bfloat16)
    h1 = jnp.maximum(
        jnp.dot(xb, w1, preferred_element_type=jnp.float32) + params["b1"], 0.0
    ).astype(jnp.bfloat16)
    h2 = jnp.maximum(
        jnp.dot(h1, w2, preferred_element_type=jnp.float32) + params["b2"], 0.0
    )
    return (jnp.sum(h2 * params["w3"].reshape(1, -1), axis=-1, keepdims=True)
            + params["b3"])


def reference_forward_f32(x, params):
    """Full-precision reference (matches the PyTorch f32 module)."""
    h1 = jnp.maximum(x @ params["w1"] + params["b1"], 0.0)
    h2 = jnp.maximum(h1 @ params["w2"] + params["b2"], 0.0)
    return h2 @ params["w3"] + params["b3"]


if __name__ == "__main__":
    key = jax.random.PRNGKey(0)
    kx, kp = jax.random.split(key)

    input_dim = 256   # baseline(input_dim=256) default MLP sizes
    batch = 520       # 2 grid steps (512 + ragged 8-row edge) -> exercises pipeline + edge
    x = jax.random.normal(kx, (batch, input_dim), jnp.float32)
    params = init_params(kp, input_dim)

    out = baseline_forward(x, params)
    out = jax.block_until_ready(out)
    assert out.shape == (batch, 1), out.shape

    ref_bf16 = reference_forward_bf16(x, params)
    ref_f32 = reference_forward_f32(x, params)
    # Same bf16 recipe -> tight; true f32 module -> loose (bf16 matmul quantization).
    assert jnp.allclose(out, ref_bf16, atol=2e-2, rtol=2e-2), "mismatch vs bf16-recipe ref"
    assert jnp.allclose(out, ref_f32, atol=1.5e-1, rtol=1.5e-1), "mismatch vs f32 ref"

    print("KERNEL_OK")
</pallas_src>

<mosaic_0001>
module attributes {stable_mosaic.version = 11 : i64} {
  func.func @mlp_kernel(%arg0: i32, %arg1: memref<512x256xf32, #tpu.memory_space<vmem>>, %arg2: memref<256x256xbf16, #tpu.memory_space<vmem>>, %arg3: memref<1x256xf32, #tpu.memory_space<vmem>>, %arg4: memref<256x256xbf16, #tpu.memory_space<vmem>>, %arg5: memref<1x256xf32, #tpu.memory_space<vmem>>, %arg6: memref<1x256xf32, #tpu.memory_space<vmem>>, %arg7: memref<1x1xf32, #tpu.memory_space<vmem>>, %arg8: memref<512x1xf32, #tpu.memory_space<vmem>>) attributes {dimension_semantics = [#tpu.dimension_semantics<parallel>], iteration_bounds = array<i64: 2>, scalar_prefetch = 0 : i64, scratch_operands = 0 : i64, tpu.core_type = #tpu.core_type<tc>, window_params = [{transform_indices = @transform_0, window_bounds = array<i64: 512, 256>}, {pipeline_mode = #tpu.pipeline_mode<synchronous>, transform_indices = @transform_1, window_bounds = array<i64: 256, 256>}, {pipeline_mode = #tpu.pipeline_mode<synchronous>, transform_indices = @transform_2, window_bounds = array<i64: 1, 256>}, {pipeline_mode = #tpu.pipeline_mode<synchronous>, transform_indices = @transform_3, window_bounds = array<i64: 256, 256>}, {pipeline_mode = #tpu.pipeline_mode<synchronous>, transform_indices = @transform_4, window_bounds = array<i64: 1, 256>}, {pipeline_mode = #tpu.pipeline_mode<synchronous>, transform_indices = @transform_5, window_bounds = array<i64: 1, 256>}, {pipeline_mode = #tpu.pipeline_mode<synchronous>, transform_indices = @transform_6, window_bounds = array<i64: 1, 1>}, {transform_indices = @transform_7, window_bounds = array<i64: 512, 1>}]} {
    %c0 = arith.constant 0 : index
    %c0_0 = arith.constant 0 : index
    %0 = vector.load %arg1[%c0, %c0_0] : memref<512x256xf32, #tpu.memory_space<vmem>>, vector<512x256xf32>
    %1 = arith.truncf %0 : vector<512x256xf32> to vector<512x256xbf16>
    %c0_1 = arith.constant 0 : index
    %c0_2 = arith.constant 0 : index
    %2 = vector.load %arg2[%c0_1, %c0_2] : memref<256x256xbf16, #tpu.memory_space<vmem>>, vector<256x256xbf16>
    %cst = arith.constant dense<0.000000e+00> : vector<512x256xf32>
    %3 = tpu.matmul %1, %2, %cst {dimension_numbers = #tpu.dot_dimension_numbers<[1], [0], [0], [1], [0, 0, 1, 1], [], []>} : vector<512x256xbf16>, vector<256x256xbf16>, vector<512x256xf32> -> vector<512x256xf32>
    %c0_3 = arith.constant 0 : index
    %c0_4 = arith.constant 0 : index
    %4 = vector.load %arg3[%c0_3, %c0_4] : memref<1x256xf32, #tpu.memory_space<vmem>>, vector<1x256xf32>
    %5 = vector.broadcast %4 : vector<1x256xf32> to vector<512x256xf32>
    %6 = arith.addf %3, %5 : vector<512x256xf32>
    %cst_5 = arith.constant 0.000000e+00 : f32
    %7 = vector.broadcast %cst_5 : f32 to vector<512x256xf32>
    %8 = arith.maximumf %6, %7 : vector<512x256xf32>
    %9 = arith.truncf %8 : vector<512x256xf32> to vector<512x256xbf16>
    %c0_6 = arith.constant 0 : index
    %c0_7 = arith.constant 0 : index
    %10 = vector.load %arg4[%c0_6, %c0_7] : memref<256x256xbf16, #tpu.memory_space<vmem>>, vector<256x256xbf16>
    %cst_8 = arith.constant dense<0.000000e+00> : vector<512x256xf32>
    %11 = tpu.matmul %9, %10, %cst_8 {dimension_numbers = #tpu.dot_dimension_numbers<[1], [0], [0], [1], [0, 0, 1, 1], [], []>} : vector<512x256xbf16>, vector<256x256xbf16>, vector<512x256xf32> -> vector<512x256xf32>
    %c0_9 = arith.constant 0 : index
    %c0_10 = arith.constant 0 : index
    %12 = vector.load %arg5[%c0_9, %c0_10] : memref<1x256xf32, #tpu.memory_space<vmem>>, vector<1x256xf32>
    %13 = vector.broadcast %12 : vector<1x256xf32> to vector<512x256xf32>
    %14 = arith.addf %11, %13 : vector<512x256xf32>
    %cst_11 = arith.constant 0.000000e+00 : f32
    %15 = vector.broadcast %cst_11 : f32 to vector<512x256xf32>
    %16 = arith.maximumf %14, %15 : vector<512x256xf32>
    %c0_12 = arith.constant 0 : index
    %c0_13 = arith.constant 0 : index
    %17 = vector.load %arg6[%c0_12, %c0_13] : memref<1x256xf32, #tpu.memory_space<vmem>>, vector<1x256xf32>
    %18 = vector.broadcast %17 : vector<1x256xf32> to vector<512x256xf32>
    %19 = arith.mulf %16, %18 : vector<512x256xf32>
    %cst_14 = arith.constant dense<0.000000e+00> : vector<512xf32>
    %20 = vector.multi_reduction <add>, %19, %cst_14 [1] : vector<512x256xf32> to vector<512xf32>
    %21 = vector.shape_cast %20 : vector<512xf32> to vector<512x1xf32>
    %c0_15 = arith.constant 0 : index
    %c0_16 = arith.constant 0 : index
    %22 = vector.load %arg7[%c0_15, %c0_16] : memref<1x1xf32, #tpu.memory_space<vmem>>, vector<1x1xf32>
    %23 = vector.broadcast %22 : vector<1x1xf32> to vector<512x1xf32>
    %24 = arith.addf %21, %23 : vector<512x1xf32>
    %c0_17 = arith.constant 0 : index
    %c0_18 = arith.constant 0 : index
    %25 = vector.load %arg8[%c0_17, %c0_18] : memref<512x1xf32, #tpu.memory_space<vmem>>, vector<512x1xf32>
    tpu.vector_store %arg8[%c0_17, %c0_18], %24 {strides = array<i32>} : memref<512x1xf32, #tpu.memory_space<vmem>>, vector<512x1xf32>,
    return
  }
  func.func @transform_0(%arg0: i32) -> (i32, i32) {
    %c0_i32 = arith.constant 0 : i32
    %c0_i32_0 = arith.constant 0 : i32
    return %arg0, %c0_i32 : i32, i32
  }
  func.func @transform_1(%arg0: i32) -> (i32, i32) {
    %c0_i32 = arith.constant 0 : i32
    %c0_i32_0 = arith.constant 0 : i32
    %c0_i32_1 = arith.constant 0 : i32
    return %c0_i32, %c0_i32_0 : i32, i32
  }
  func.func @transform_2(%arg0: i32) -> (i32, i32) {
    %c0_i32 = arith.constant 0 : i32
    %c0_i32_0 = arith.constant 0 : i32
    %c0_i32_1 = arith.constant 0 : i32
    return %c0_i32, %c0_i32_0 : i32, i32
  }
  func.func @transform_3(%arg0: i32) -> (i32, i32) {
    %c0_i32 = arith.constant 0 : i32
    %c0_i32_0 = arith.constant 0 : i32
    %c0_i32_1 = arith.constant 0 : i32
    return %c0_i32, %c0_i32_0 : i32, i32
  }
  func.func @transform_4(%arg0: i32) -> (i32, i32) {
    %c0_i32 = arith.constant 0 : i32
    %c0_i32_0 = arith.constant 0 : i32
    %c0_i32_1 = arith.constant 0 : i32
    return %c0_i32, %c0_i32_0 : i32, i32
  }
  func.func @transform_5(%arg0: i32) -> (i32, i32) {
    %c0_i32 = arith.constant 0 : i32
    %c0_i32_0 = arith.constant 0 : i32
    %c0_i32_1 = arith.constant 0 : i32
    return %c0_i32, %c0_i32_0 : i32, i32
  }
  func.func @transform_6(%arg0: i32) -> (i32, i32) {
    %c0_i32 = arith.constant 0 : i32
    %c0_i32_0 = arith.constant 0 : i32
    %c0_i32_1 = arith.constant 0 : i32
    return %c0_i32, %c0_i32_0 : i32, i32
  }
  func.func @transform_7(%arg0: i32) -> (i32, i32) {
    %c0_i32 = arith.constant 0 : i32
    %c0_i32_0 = arith.constant 0 : i32
    return %arg0, %c0_i32 : i32, i32
  }
}

</mosaic_0001>

<llo_original>
// kernel: tpu_custom_call.1
$region0: #{tpu_custom_call.1}
  #allocation0 [shape = 'u32[]', space=smem, size = 0x4, offset = 0x4, fixed_abs, tag = 'smem constant byte address 0x4 - core index']
  #allocation1 [shape = 'u32[144,128]{1,0:T(1,128)}', space=vmem, size = 0x12000, scoped, tag = 'internal scratch']
  #allocation2 [shape = 'f32[1,1]{1,0:T(1,128)S(1)}', space=vmem, size = 0x200, scoped, tag = 'scoped memory for tpu_custom_call.1']
  %s0 = inlined_call_operand.hbm [shape: f32[520,256], index: 0, kind: input, shape index: {}]
  %s1 = inlined_call_operand.hbm [shape: bf16[256,256], index: 1, kind: input, shape index: {}]
  %s2 = inlined_call_operand.vmem [shape: f32[1,256], index: 2, kind: input, shape index: {}]
  %s3 = inlined_call_operand.hbm [shape: bf16[256,256], index: 3, kind: input, shape index: {}]
  %s4 = inlined_call_operand.vmem [shape: f32[1,256], index: 4, kind: input, shape index: {}]
  %s5 = inlined_call_operand.vmem [shape: f32[1,256], index: 5, kind: input, shape index: {}]
  %s6 = inlined_call_operand.<no memory space> [shape: f32[1,1], index: 6, kind: input, shape index: {}]
  %s7 = inlined_call_operand.vmem [shape: f32[520,1], index: 7, kind: output, shape index: {}]
  %s8 = sld [smem:[#allocation0]]
  $region121: #{tpu_custom_call.1} parent=0
    _
  %s10 = ssub.s32 1, %s8
  %s11 = scalar_select 0, %s10, %s8
  %v12 = vstv %s6
  %13 = vst [vmem:[#allocation2] sm:$0x1] %v12
  $region1: #{tpu_custom_call.1} parent=0
    #allocation3 [shape = 'u8[1048576]{0}', space=vmem, size = 0x100000, scoped, tag = 'input window, operand 0']
    #allocation4 [shape = 's32[2]{0}', space=sflag, size = 0x8, scoped, tag = 'scoped memory for tpu_custom_call.1']
    #allocation5 [shape = 'u8[131072]{0}', space=vmem, size = 0x20000, scoped, tag = 'input window, operand 1, single buffered']
    #allocation6 [shape = 's32[1]{0}', space=sflag, size = 0x4, scoped, tag = 'scoped memory for tpu_custom_call.1']
    #allocation7 [shape = 'u8[131072]{0}', space=vmem, size = 0x20000, scoped, tag = 'input window, operand 3, single buffered']
    #allocation8 [shape = 'u8[524288]{0}', space=vmem, size = 0x80000, scoped, tag = 'output window, operand 0']
    %14 = vsyncpa [#allocation4], 0
    %s15 = scalar_lea.sflag [#allocation4], 1
    %16 = vsyncpa %s15, 0
    %17 = vsyncpa [#allocation6], 0
    loop: start=0, step=1, limit=4
    $region2: #{tpu_custom_call.1} parent=1 // loop_pre_header
      _
    $region3: #{tpu_custom_call.1} parent=1 // loop_header
      %s19 = sphi 0, %s23
      %p20 = scmp.ge.s32.totalorder %s19, 4
      %s29 = sphi 0, %s31
      %s32 = sphi 0, %s29
      %s33 = sphi 0, %s32
      %s49 = sphi 0, %s33
      %s53 = sphi 0, %s53
      %s55 = sphi 0, %s53
      %s56 = sphi 0, %s55
      %s70 = sphi 0, %s56
      %s74 = sphi 0, %s74
      %s76 = sphi 0, %s74
      %s77 = sphi 0, %s76
      %s91 = sphi 0, %s77
      %s95 = sphi 0, %s95
      %s97 = sphi 0, %s95
      %s98 = sphi 0, %s97
      %s112 = sphi 0, %s98
      %s116 = sphi 0, %s116
      %s118 = sphi 0, %s116
      %s119 = sphi 0, %s118
      %s133 = sphi 0, %s119
      %s137 = sphi 0, %s137
      %s139 = sphi 0, %s137
      %s140 = sphi 0, %s139
      %s154 = sphi 0, %s140
      %s158 = sphi 0, %s158
      %s160 = sphi 0, %s158
      %s161 = sphi 0, %s160
      %s175 = sphi 0, %s161
      %s181 = sphi 0, %s183
      %s184 = sphi 0, %s181
      %s185 = sphi 0, %s184
      %s201 = sphi 0, %s185
    $region4: #{tpu_custom_call.1} parent=1 // loop_header_branch
      %22 = sbr.rel (%p20) target = $region8
    $region5: #{tpu_custom_call.1} parent=1 // loop_body
      %s24 = ssub.s32 %s19, 1
      %s25 = ssub.s32 %s19, 2
      %s26 = sadd.s32 %s19, 1
      %s27 = ssub.s32 %s19, %s26
      %p28 = scmp.eq.s32.totalorder %s27, 0
      %s30 = sadd.s32 %s29, 1
      %s31 = scalar_select %p28, %s29, %s30
      %p34 = pneg %p28
      %p35 = scmp.eq.s32.totalorder %s19, 1
      %p36 = por %p34, %p35
      %p37 = scmp.ne.s32.totalorder %s29, %s32
      %p38 = scmp.eq.s32.totalorder %s19, 0
      %p39 = por %p37, %p38
      %p40 = scmp.ne.s32.totalorder %s29, %s32
      %p41 = scmp.eq.s32.totalorder %s24, 1
      %p42 = por %p40, %p41
      %p43 = scmp.ne.s32.totalorder %s32, %s33
      %p44 = scmp.eq.s32.totalorder %s24, 0
      %p45 = por %p43, %p44
      %p46 = scmp.ne.s32.totalorder %s32, %s33
      %p47 = scmp.eq.s32.totalorder %s25, 1
      %p48 = por %p46, %p47
      %p50 = scmp.ne.s32.totalorder %s33, %s49
      %p51 = scmp.eq.s32.totalorder %s25, 0
      %p52 = por %p50, %p51
      %s54 = sadd.s32 %s53, 1
      %p57 = scmp.eq.s32.totalorder %s19, 1
      %p58 = scmp.ne.s32.totalorder %s53, %s55
      %p59 = scmp.eq.s32.totalorder %s19, 0
      %p60 = por %p58, %p59
      %p61 = scmp.ne.s32.totalorder %s53, %s55
      %p62 = scmp.eq.s32.totalorder %s24, 1
      %p63 = por %p61, %p62
      %p64 = scmp.ne.s32.totalorder %s55, %s56
      %p65 = scmp.eq.s32.totalorder %s24, 0
      %p66 = por %p64, %p65
      %p67 = scmp.ne.s32.totalorder %s55, %s56
      %p68 = scmp.eq.s32.totalorder %s25, 1
      %p69 = por %p67, %p68
      %p71 = scmp.ne.s32.totalorder %s56, %s70
      %p72 = scmp.eq.s32.totalorder %s25, 0
      %p73 = por %p71, %p72
      %s75 = sadd.s32 %s74, 1
      %p78 = scmp.eq.s32.totalorder %s19, 1
      %p79 = scmp.ne.s32.totalorder %s74, %s76
      %p80 = scmp.eq.s32.totalorder %s19, 0
      %p81 = por %p79, %p80
      %p82 = scmp.ne.s32.totalorder %s74, %s76
      %p83 = scmp.eq.s32.totalorder %s24, 1
      %p84 = por %p82, %p83
      %p85 = scmp.ne.s32.totalorder %s76, %s77
      %p86 = scmp.eq.s32.totalorder %s24, 0
      %p87 = por %p85, %p86
      %p88 = scmp.ne.s32.totalorder %s76, %s77
      %p89 = scmp.eq.s32.totalorder %s25, 1
      %p90 = por %p88, %p89
      %p92 = scmp.ne.s32.totalorder %s77, %s91
      %p93 = scmp.eq.s32.totalorder %s25, 0
      %p94 = por %p92, %p93
      %s96 = sadd.s32 %s95, 1
      %p99 = scmp.eq.s32.totalorder %s19, 1
      %p100 = scmp.ne.s32.totalorder %s95, %s97
      %p101 = scmp.eq.s32.totalorder %s19, 0
      %p102 = por %p100, %p101
      %p103 = scmp.ne.s32.totalorder %s95, %s97
      %p104 = scmp.eq.s32.totalorder %s24, 1
      %p105 = por %p103, %p104
      %p106 = scmp.ne.s32.totalorder %s97, %s98
      %p107 = scmp.eq.s32.totalorder %s24, 0
      %p108 = por %p106, %p107
      %p109 = scmp.ne.s32.totalorder %s97, %s98
      %p110 = scmp.eq.s32.totalorder %s25, 1
      %p111 = por %p109, %p110
      %p113 = scmp.ne.s32.totalorder %s98, %s112
      %p114 = scmp.eq.s32.totalorder %s25, 0
      %p115 = por %p113, %p114
      %s117 = sadd.s32 %s116, 1
      %p120 = scmp.eq.s32.totalorder %s19, 1
      %p121 = scmp.ne.s32.totalorder %s116, %s118
      %p122 = scmp.eq.s32.totalorder %s19, 0
      %p123 = por %p121, %p122
      %p124 = scmp.ne.s32.totalorder %s116, %s118
      %p125 = scmp.eq.s32.totalorder %s24, 1
      %p126 = por %p124, %p125
      %p127 = scmp.ne.s32.totalorder %s118, %s119
      %p128 = scmp.eq.s32.totalorder %s24, 0
      %p129 = por %p127, %p128
      %p130 = scmp.ne.s32.totalorder %s118, %s119
      %p131 = scmp.eq.s32.totalorder %s25, 1
      %p132 = por %p130, %p131
      %p134 = scmp.ne.s32.totalorder %s119, %s133
      %p135 = scmp.eq.s32.totalorder %s25, 0
      %p136 = por %p134, %p135
      %s138 = sadd.s32 %s137, 1
      %p141 = scmp.eq.s32.totalorder %s19, 1
      %p142 = scmp.ne.s32.totalorder %s137, %s139
      %p143 = scmp.eq.s32.totalorder %s19, 0
      %p144 = por %p142, %p143
      %p145 = scmp.ne.s32.totalorder %s137, %s139
      %p146 = scmp.eq.s32.totalorder %s24, 1
      %p147 = por %p145, %p146
      %p148 = scmp.ne.s32.totalorder %s139, %s140
      %p149 = scmp.eq.s32.totalorder %s24, 0
      %p150 = por %p148, %p149
      %p151 = scmp.ne.s32.totalorder %s139, %s140
      %p152 = scmp.eq.s32.totalorder %s25, 1
      %p153 = por %p151, %p152
      %p155 = scmp.ne.s32.totalorder %s140, %s154
      %p156 = scmp.eq.s32.totalorder %s25, 0
      %p157 = por %p155, %p156
      %s159 = sadd.s32 %s158, 1
      %p162 = scmp.eq.s32.totalorder %s19, 1
      %p163 = scmp.ne.s32.totalorder %s158, %s160
      %p164 = scmp.eq.s32.totalorder %s19, 0
      %p165 = por %p163, %p164
      %p166 = scmp.ne.s32.totalorder %s158, %s160
      %p167 = scmp.eq.s32.totalorder %s24, 1
      %p168 = por %p166, %p167
      %p169 = scmp.ne.s32.totalorder %s160, %s161
      %p170 = scmp.eq.s32.totalorder %s24, 0
      %p171 = por %p169, %p170
      %p172 = scmp.ne.s32.totalorder %s160, %s161
      %p173 = scmp.eq.s32.totalorder %s25, 1
      %p174 = por %p172, %p173
      %p176 = scmp.ne.s32.totalorder %s161, %s175
      %p177 = scmp.eq.s32.totalorder %s25, 0
      %p178 = por %p176, %p177
      %s179 = ssub.s32 %s19, %s26
      %p180 = scmp.eq.s32.totalorder %s179, 0
      %s182 = sadd.s32 %s181, 1
      %s183 = scalar_select %p180, %s181, %s182
      %p186 = pneg %p180
      %p187 = scmp.eq.s32.totalorder %s19, 1
      %p188 = por %p186, %p187
      %p189 = scmp.ne.s32.totalorder %s181, %s184
      %p190 = scmp.eq.s32.totalorder %s19, 0
      %p191 = por %p189, %p190
      %p192 = scmp.ne.s32.totalorder %s181, %s184
      %p193 = scmp.eq.s32.totalorder %s24, 1
      %p194 = por %p192, %p193
      %p195 = scmp.ne.s32.totalorder %s184, %s185
      %p196 = scmp.eq.s32.totalorder %s24, 0
      %p197 = por %p195, %p196
      %p198 = scmp.ne.s32.totalorder %s184, %s185
      %p199 = scmp.eq.s32.totalorder %s25, 1
      %p200 = por %p198, %p199
      %p202 = scmp.ne.s32.totalorder %s185, %s201
      %p203 = scmp.eq.s32.totalorder %s25, 0
      %p204 = por %p202, %p203
      %p205 = scmp.le.s32.totalorder 1, %s19
      %p206 = scmp.lt.s32.totalorder %s19, 3
      %p207 = pnand %p205, %p206
      %p208 = pneg %p207
      // Predicated region
      $region9: #{tpu_custom_call.1} parent=5 // pred_check
        _
      $region10: #{tpu_custom_call.1} parent=5 // pred_check_branch
        %210 = sbr.rel (%p207) target = $region12
      $region11: #{tpu_custom_call.1} parent=5 // pred_region
        %s211 = ssub.s32 %s19, 1
        // Predicated region
        $region13: #{tpu_custom_call.1} parent=11 // pred_check
          %p212 = pneg %p66
        $region14: #{tpu_custom_call.1} parent=11 // pred_check_branch
          %214 = sbr.rel (%p212) target = $region16
        $region15: #{tpu_custom_call.1} parent=11 // pred_region
          %s216 = ssub.s32 4096, 4096
          %217 = vsyncadd [#allocation6], %s216
          %s218 = sshll.u32 [#allocation5], 4
          %s219 = int_to_ptr.vmem [resolvable:$true] %s218
          %224 = dma.hbm_to_vmem [thread:$0]  %s1, 4096, %s219, [#allocation6], 128, 128, 8
        $region16: #{tpu_custom_call.1} parent=11 // pred_fallthru
          _
        // Predicated region
        $region17: #{tpu_custom_call.1} parent=11 // pred_check
          %p225 = pneg %p87
        $region18: #{tpu_custom_call.1} parent=11 // pred_check_branch
          %227 = sbr.rel (%p225) target = $region20
        $region19: #{tpu_custom_call.1} parent=11 // pred_region
          _
        $region20: #{tpu_custom_call.1} parent=11 // pred_fallthru
          _
        // Predicated region
        $region21: #{tpu_custom_call.1} parent=11 // pred_check
          %p228 = pneg %p108
        $region22: #{tpu_custom_call.1} parent=11 // pred_check_branch
          %230 = sbr.rel (%p228) target = $region24
        $region23: #{tpu_custom_call.1} parent=11 // pred_region
          %s232 = ssub.s32 4096, 4096
          %233 = vsyncadd [#allocation6], %s232
          %s234 = sshll.u32 [#allocation7], 4
          %s235 = int_to_ptr.vmem [resolvable:$true] %s234
          %240 = dma.hbm_to_vmem [thread:$0]  %s3, 4096, %s235, [#allocation6], 128, 128, 8
        $region24: #{tpu_custom_call.1} parent=11 // pred_fallthru
          _
        // Predicated region
        $region25: #{tpu_custom_call.1} parent=11 // pred_check
          %p241 = pneg %p129
        $region26: #{tpu_custom_call.1} parent=11 // pred_check_branch
          %243 = sbr.rel (%p241) target = $region28
        $region27: #{tpu_custom_call.1} parent=11 // pred_region
          _
        $region28: #{tpu_custom_call.1} parent=11 // pred_fallthru
          _
        // Predicated region
        $region29: #{tpu_custom_call.1} parent=11 // pred_check
          %p244 = pneg %p150
        $region30: #{tpu_custom_call.1} parent=11 // pred_check_branch
          %246 = sbr.rel (%p244) target = $region32
        $region31: #{tpu_custom_call.1} parent=11 // pred_region
          _
        $region32: #{tpu_custom_call.1} parent=11 // pred_fallthru
          _
        // Predicated region
        $region33: #{tpu_custom_call.1} parent=11 // pred_check
          %p247 = pneg %p171
        $region34: #{tpu_custom_call.1} parent=11 // pred_check_branch
          %249 = sbr.rel (%p247) target = $region36
        $region35: #{tpu_custom_call.1} parent=11 // pred_region
          _
        $region36: #{tpu_custom_call.1} parent=11 // pred_fallthru
          _
      $region12: #{tpu_custom_call.1} parent=5 // pred_fallthru
        _
      %p250 = scmp.lt.s32.totalorder %s19, 2
      // Predicated region
      $region37: #{tpu_custom_call.1} parent=5 // pred_check
        %p251 = pneg %p250
      $region38: #{tpu_custom_call.1} parent=5 // pred_check_branch
        %253 = sbr.rel (%p251) target = $region40
      $region39: #{tpu_custom_call.1} parent=5 // pred_region
        // Predicated region
        $region41: #{tpu_custom_call.1} parent=39 // pred_check
          %p254 = pneg %p39
        $region42: #{tpu_custom_call.1} parent=39 // pred_check_branch
          %256 = sbr.rel (%p254) target = $region44
        $region43: #{tpu_custom_call.1} parent=39 // pred_region
          %s257 = sand.u32 %s29, 1
          %s258 = scalar_lea.sflag [#allocation4], %s257
          %s259 = sand.u32 %s29, 1
          %s260 = smul.addr %s259, 1024
          %s261 = scalar_lea.vmem [#allocation3], %s260
          %s262 = smul.u32 64, %s19
          %s263 = ssub.s32 65, %s262
          %p264 = scmp.lt.s32.totalorder %s263, 64
          %s265 = scalar_select %p264, %s263, 64
          %s266 = smul.u32 128, %s265
          %s267 = smul.u32 %s266, 2
          %s269 = ssub.s32 16384, %s267
          %270 = vsyncadd %s258, %s269
          %p271 = scmp.ne.s32.totalorder 0, %s267
          %s272 = smul.addr %s262, 2
          %s273 = smul.addr %s272, 128
          %s274 = scalar_lea.hbm %s0, %s273
          %s275 = smul.u32 16, %s265
          %s276 = sshll.u32 %s261, 4
          %s277 = int_to_ptr.vmem [resolvable:$true] %s276
          %s278 = sshll.u32 %s275, 4
          %282 = dma.hbm_to_vmem [thread:$0]  (%p271), %s274, %s278, %s277, %s258, 256, 256, 16
        $region44: #{tpu_custom_call.1} parent=39 // pred_fallthru
          _
      $region40: #{tpu_custom_call.1} parent=5 // pred_fallthru
        _
      %p283 = scmp.le.s32.totalorder 1, %s19
      %p284 = scmp.lt.s32.totalorder %s19, 3
      %p285 = pnand %p283, %p284
      %p286 = pneg %p285
      // Predicated region
      $region45: #{tpu_custom_call.1} parent=5 // pred_check
        _
      $region46: #{tpu_custom_call.1} parent=5 // pred_check_branch
        %288 = sbr.rel (%p285) target = $region48
      $region47: #{tpu_custom_call.1} parent=5 // pred_region
        %s289 = ssub.s32 %s19, 1
        %s290 = sand.u32 %s32, 1
        %s291 = scalar_lea.sflag [#allocation4], %s290
        %s292 = sand.u32 %s32, 1
        %s293 = smul.addr %s292, 1024
        %s294 = scalar_lea.vmem [#allocation3], %s293
        // Predicated region
        $region49: #{tpu_custom_call.1} parent=47 // pred_check
          %p295 = pneg %p45
        $region50: #{tpu_custom_call.1} parent=47 // pred_check_branch
          %297 = sbr.rel (%p295) target = $region52
        $region51: #{tpu_custom_call.1} parent=47 // pred_region
          %298 = dma.done %s291, 16384
        $region52: #{tpu_custom_call.1} parent=47 // pred_fallthru
          _
        // Predicated region
        $region53: #{tpu_custom_call.1} parent=47 // pred_check
          %p299 = pneg %p66
        $region54: #{tpu_custom_call.1} parent=47 // pred_check_branch
          %301 = sbr.rel (%p299) target = $region56
        $region55: #{tpu_custom_call.1} parent=47 // pred_region
          %302 = dma.done [#allocation6], 4096
        $region56: #{tpu_custom_call.1} parent=47 // pred_fallthru
          _
        // Predicated region
        $region57: #{tpu_custom_call.1} parent=47 // pred_check
          %p303 = pneg %p108
        $region58: #{tpu_custom_call.1} parent=47 // pred_check_branch
          %305 = sbr.rel (%p303) target = $region60
        $region59: #{tpu_custom_call.1} parent=47 // pred_region
          %306 = dma.done [#allocation6], 4096
        $region60: #{tpu_custom_call.1} parent=47 // pred_fallthru
          _
        %s307 = sand.u32 %s32, 1
        %s308 = scalar_lea.sflag [#allocation4], %s307
        %s309 = sand.u32 %s32, 1
        %s310 = smul.addr %s309, 1024
        %s311 = scalar_lea.vmem [#allocation3], %s310
        %p312 = pneg %p45
        %p313 = pneg %p42
        %p314 = pneg %p66
        %p315 = pneg %p63
        %p316 = pneg %p87
        %p317 = pneg %p84
        %p318 = pneg %p108
        %p319 = pneg %p105
        %p320 = pneg %p129
        %p321 = pneg %p126
        %p322 = pneg %p150
        %p323 = pneg %p147
        %p324 = pneg %p171
        %p325 = pneg %p168
        %p326 = pneg %p197
        %p327 = pneg %p194
        %s328 = sand.u32 %s184, 1
        %s329 = sand.u32 %s184, 1
        %s330 = smul.addr %s329, 512
        %s331 = scalar_lea.vmem [#allocation8], %s330
        %s332 = smul.u32 64, %s24
        %s333 = ssub.s32 65, %s332
        %p334 = scmp.lt.s32.totalorder %s333, 64
        %s335 = scalar_select %p334, %s333, 64
        %s336 = smul.u32 128, %s335
        %s337 = smul.u32 %s336, 2
        %s338 = smul.u32 64, %s24
        %s339 = ssub.s32 65, %s338
        %p340 = scmp.lt.s32.totalorder %s339, 64
        %s341 = scalar_select %p340, %s339, 64
        %s342 = smul.u32 128, %s341
        %v343 = vld [vmem:[%s294] sm:$0xff]
        %v344 = vld [vmem:[%s294 + $0x8] sm:$0xff]
        %v345 = vld [vmem:[%s294 + $0x10] sm:$0xff]
        %v346 = vld [vmem:[%s294 + $0x18] sm:$0xff]
        %v347 = vld [vmem:[%s294 + $0x20] sm:$0xff]
        %v348 = vld [vmem:[%s294 + $0x28] sm:$0xff]
        %v349 = vld [vmem:[%s294 + $0x30] sm:$0xff]
        %v350 = vld [vmem:[%s294 + $0x38] sm:$0xff]
        %v351 = vld [vmem:[%s294 + $0x40] sm:$0xff]
        %v352 = vld [vmem:[%s294 + $0x48] sm:$0xff]
        %v353 = vld [vmem:[%s294 + $0x50] sm:$0xff]
        %v354 = vld [vmem:[%s294 + $0x58] sm:$0xff]
        %v355 = vld [vmem:[%s294 + $0x60] sm:$0xff]
        %v356 = vld [vmem:[%s294 + $0x68] sm:$0xff]
        %v357 = vld [vmem:[%s294 + $0x70] sm:$0xff]
        %v358 = vld [vmem:[%s294 + $0x78] sm:$0xff]
        %v359 = vld [vmem:[%s294 + $0x80] sm:$0xff]
        %v360 = vld [vmem:[%s294 + $0x88] sm:$0xff]
        %v361 = vld [vmem:[%s294 + $0x90] sm:$0xff]
        %v362 = vld [vmem:[%s294 + $0x98] sm:$0xff]
        %v363 = vld [vmem:[%s294 + $0xa0] sm:$0xff]
        %v364 = vld [vmem:[%s294 + $0xa8] sm:$0xff]
        %v365 = vld [vmem:[%s294 + $0xb0] sm:$0xff]
        %v366 = vld [vmem:[%s294 + $0xb8] sm:$0xff]
        %v367 = vld [vmem:[%s294 + $0xc0] sm:$0xff]
        %v368 = vld [vmem:[%s294 + $0xc8] sm:$0xff]
        %v369 = vld [vmem:[%s294 + $0xd0] sm:$0xff]
        %v370 = vld [vmem:[%s294 + $0xd8] sm:$0xff]
        %v371 = vld [vmem:[%s294 + $0xe0] sm:$0xff]
        %v372 = vld [vmem:[%s294 + $0xe8] sm:$0xff]
        %v373 = vld [vmem:[%s294 + $0xf0] sm:$0xff]
        %v374 = vld [vmem:[%s294 + $0xf8] sm:$0xff]
        %v375 = vld [vmem:[%s294 + $0x100] sm:$0xff]
        %v376 = vld [vmem:[%s294 + $0x108] sm:$0xff]
        %v377 = vld [vmem:[%s294 + $0x110] sm:$0xff]
        %v378 = vld [vmem:[%s294 + $0x118] sm:$0xff]
        %v379 = vld [vmem:[%s294 + $0x120] sm:$0xff]
        %v380 = vld [vmem:[%s294 + $0x128] sm:$0xff]
        %v381 = vld [vmem:[%s294 + $0x130] sm:$0xff]
        %v382 = vld [vmem:[%s294 + $0x138] sm:$0xff]
        %v383 = vld [vmem:[%s294 + $0x140] sm:$0xff]
        %v384 = vld [vmem:[%s294 + $0x148] sm:$0xff]
        %v385 = vld [vmem:[%s294 + $0x150] sm:$0xff]
        %v386 = vld [vmem:[%s294 + $0x158] sm:$0xff]
        %v387 = vld [vmem:[%s294 + $0x160] sm:$0xff]
        %v388 = vld [vmem:[%s294 + $0x168] sm:$0xff]
        %v389 = vld [vmem:[%s294 + $0x170] sm:$0xff]
        %v390 = vld [vmem:[%s294 + $0x178] sm:$0xff]
        %v391 = vld [vmem:[%s294 + $0x180] sm:$0xff]
        %v392 = vld [vmem:[%s294 + $0x188] sm:$0xff]
        %v393 = vld [vmem:[%s294 + $0x190] sm:$0xff]
        %v394 = vld [vmem:[%s294 + $0x198] sm:$0xff]
        %v395 = vld [vmem:[%s294 + $0x1a0] sm:$0xff]
        %v396 = vld [vmem:[%s294 + $0x1a8] sm:$0xff]
        %v397 = vld [vmem:[%s294 + $0x1b0] sm:$0xff]
        %v398 = vld [vmem:[%s294 + $0x1b8] sm:$0xff]
        %v399 = vld [vmem:[%s294 + $0x1c0] sm:$0xff]
        %v400 = vld [vmem:[%s294 + $0x1c8] sm:$0xff]
        %v401 = vld [vmem:[%s294 + $0x1d0] sm:$0xff]
        %v402 = vld [vmem:[%s294 + $0x1d8] sm:$0xff]
        %v403 = vld [vmem:[%s294 + $0x1e0] sm:$0xff]
        %v404 = vld [vmem:[%s294 + $0x1e8] sm:$0xff]
        %v405 = vld [vmem:[%s294 + $0x1f0] sm:$0xff]
        %v406 = vld [vmem:[%s294 + $0x1f8] sm:$0xff]
        %v407 = vld [vmem:[%s294 + $0x200] sm:$0xff]
        %v408 = vld [vmem:[%s294 + $0x208] sm:$0xff]
        %v409 = vld [vmem:[%s294 + $0x210] sm:$0xff]
        %v410 = vld [vmem:[%s294 + $0x218] sm:$0xff]
        %v411 = vld [vmem:[%s294 + $0x220] sm:$0xff]
        %v412 = vld [vmem:[%s294 + $0x228] sm:$0xff]
        %v413 = vld [vmem:[%s294 + $0x230] sm:$0xff]
        %v414 = vld [vmem:[%s294 + $0x238] sm:$0xff]
        %v415 = vld [vmem:[%s294 + $0x240] sm:$0xff]
        %v416 = vld [vmem:[%s294 + $0x248] sm:$0xff]
        %v417 = vld [vmem:[%s294 + $0x250] sm:$0xff]
        %v418 = vld [vmem:[%s294 + $0x258] sm:$0xff]
        %v419 = vld [vmem:[%s294 + $0x260] sm:$0xff]
        %v420 = vld [vmem:[%s294 + $0x268] sm:$0xff]
        %v421 = vld [vmem:[%s294 + $0x270] sm:$0xff]
        %v422 = vld [vmem:[%s294 + $0x278] sm:$0xff]
        %v423 = vld [vmem:[%s294 + $0x280] sm:$0xff]
        %v424 = vld [vmem:[%s294 + $0x288] sm:$0xff]
        %v425 = vld [vmem:[%s294 + $0x290] sm:$0xff]
        %v426 = vld [vmem:[%s294 + $0x298] sm:$0xff]
        %v427 = vld [vmem:[%s294 + $0x2a0] sm:$0xff]
        %v428 = vld [vmem:[%s294 + $0x2a8] sm:$0xff]
        %v429 = vld [vmem:[%s294 + $0x2b0] sm:$0xff]
        %v430 = vld [vmem:[%s294 + $0x2b8] sm:$0xff]
        %v431 = vld [vmem:[%s294 + $0x2c0] sm:$0xff]
        %v432 = vld [vmem:[%s294 + $0x2c8] sm:$0xff]
        %v433 = vld [vmem:[%s294 + $0x2d0] sm:$0xff]
        %v434 = vld [vmem:[%s294 + $0x2d8] sm:$0xff]
        %v435 = vld [vmem:[%s294 + $0x2e0] sm:$0xff]
        %v436 = vld [vmem:[%s294 + $0x2e8] sm:$0xff]
        %v437 = vld [vmem:[%s294 + $0x2f0] sm:$0xff]
        %v438 = vld [vmem:[%s294 + $0x2f8] sm:$0xff]
        %v439 = vld [vmem:[%s294 + $0x300] sm:$0xff]
        %v440 = vld [vmem:[%s294 + $0x308] sm:$0xff]
        %v441 = vld [vmem:[%s294 + $0x310] sm:$0xff]
        %v442 = vld [vmem:[%s294 + $0x318] sm:$0xff]
        %v443 = vld [vmem:[%s294 + $0x320] sm:$0xff]
        %v444 = vld [vmem:[%s294 + $0x328] sm:$0xff]
        %v445 = vld [vmem:[%s294 + $0x330] sm:$0xff]
        %v446 = vld [vmem:[%s294 + $0x338] sm:$0xff]
        %v447 = vld [vmem:[%s294 + $0x340] sm:$0xff]
        %v448 = vld [vmem:[%s294 + $0x348] sm:$0xff]
        %v449 = vld [vmem:[%s294 + $0x350] sm:$0xff]
        %v450 = vld [vmem:[%s294 + $0x358] sm:$0xff]
        %v451 = vld [vmem:[%s294 + $0x360] sm:$0xff]
        %v452 = vld [vmem:[%s294 + $0x368] sm:$0xff]
        %v453 = vld [vmem:[%s294 + $0x370] sm:$0xff]
        %v454 = vld [vmem:[%s294 + $0x378] sm:$0xff]
        %v455 = vld [vmem:[%s294 + $0x380] sm:$0xff]
        %v456 = vld [vmem:[%s294 + $0x388] sm:$0xff]
        %v457 = vld [vmem:[%s294 + $0x390] sm:$0xff]
        %v458 = vld [vmem:[%s294 + $0x398] sm:$0xff]
        %v459 = vld [vmem:[%s294 + $0x3a0] sm:$0xff]
        %v460 = vld [vmem:[%s294 + $0x3a8] sm:$0xff]
        %v461 = vld [vmem:[%s294 + $0x3b0] sm:$0xff]
        %v462 = vld [vmem:[%s294 + $0x3b8] sm:$0xff]
        %v463 = vld [vmem:[%s294 + $0x3c0] sm:$0xff]
        %v464 = vld [vmem:[%s294 + $0x3c8] sm:$0xff]
        %v465 = vld [vmem:[%s294 + $0x3d0] sm:$0xff]
        %v466 = vld [vmem:[%s294 + $0x3d8] sm:$0xff]
        %v467 = vld [vmem:[%s294 + $0x3e0] sm:$0xff]
        %v468 = vld [vmem:[%s294 + $0x3e8] sm:$0xff]
        %v469 = vld [vmem:[%s294 + $0x3f0] sm:$0xff]
        %v470 = vld [vmem:[%s294 + $0x3f8] sm:$0xff]
        %v471 = vpack.c.bf16 %v345, %v343
        %v472 = vpack.c.bf16 %v346, %v344
        %v473 = vpack.c.bf16 %v349, %v347
        %v474 = vpack.c.bf16 %v350, %v348
        %v475 = vpack.c.bf16 %v353, %v351
        %v476 = vpack.c.bf16 %v354, %v352
        %v477 = vpack.c.bf16 %v357, %v355
        %v478 = vpack.c.bf16 %v358, %v356
        %v479 = vpack.c.bf16 %v361, %v359
        %v480 = vpack.c.bf16 %v362, %v360
        %v481 = vpack.c.bf16 %v365, %v363
        %v482 = vpack.c.bf16 %v366, %v364
        %v483 = vpack.c.bf16 %v369, %v367
        %v484 = vpack.c.bf16 %v370, %v368
        %v485 = vpack.c.bf16 %v373, %v371
        %v486 = vpack.c.bf16 %v374, %v372
        %v487 = vpack.c.bf16 %v377, %v375
        %v488 = vpack.c.bf16 %v378, %v376
        %v489 = vpack.c.bf16 %v381, %v379
        %v490 = vpack.c.bf16 %v382, %v380
        %v491 = vpack.c.bf16 %v385, %v383
        %v492 = vpack.c.bf16 %v386, %v384
        %v493 = vpack.c.bf16 %v389, %v387
        %v494 = vpack.c.bf16 %v390, %v388
        %v495 = vpack.c.bf16 %v393, %v391
        %v496 = vpack.c.bf16 %v394, %v392
        %v497 = vpack.c.bf16 %v397, %v395
        %v498 = vpack.c.bf16 %v398, %v396
        %v499 = vpack.c.bf16 %v401, %v399
        %v500 = vpack.c.bf16 %v402, %v400
        %v501 = vpack.c.bf16 %v405, %v403
        %v502 = vpack.c.bf16 %v406, %v404
        %v503 = vpack.c.bf16 %v409, %v407
        %v504 = vpack.c.bf16 %v410, %v408
        %v505 = vpack.c.bf16 %v413, %v411
        %v506 = vpack.c.bf16 %v414, %v412
        %v507 = vpack.c.bf16 %v417, %v415
        %v508 = vpack.c.bf16 %v418, %v416
        %v509 = vpack.c.bf16 %v421, %v419
        %v510 = vpack.c.bf16 %v422, %v420
        %v511 = vpack.c.bf16 %v425, %v423
        %v512 = vpack.c.bf16 %v426, %v424
        %v513 = vpack.c.bf16 %v429, %v427
        %v514 = vpack.c.bf16 %v430, %v428
        %v515 = vpack.c.bf16 %v433, %v431
        %v516 = vpack.c.bf16 %v434, %v432
        %v517 = vpack.c.bf16 %v437, %v435
        %v518 = vpack.c.bf16 %v438, %v436
        %v519 = vpack.c.bf16 %v441, %v439
        %v520 = vpack.c.bf16 %v442, %v440
        %v521 = vpack.c.bf16 %v445, %v443
        %v522 = vpack.c.bf16 %v446, %v444
        %v523 = vpack.c.bf16 %v449, %v447
        %v524 = vpack.c.bf16 %v450, %v448
        %v525 = vpack.c.bf16 %v453, %v451
        %v526 = vpack.c.bf16 %v454, %v452
        %v527 = vpack.c.bf16 %v457, %v455
        %v528 = vpack.c.bf16 %v458, %v456
        %v529 = vpack.c.bf16 %v461, %v459
        %v530 = vpack.c.bf16 %v462, %v460
        %v531 = vpack.c.bf16 %v465, %v463
        %v532 = vpack.c.bf16 %v466, %v464
        %v533 = vpack.c.bf16 %v469, %v467
        %v534 = vpack.c.bf16 %v470, %v468
        %v535 = vld [vmem:[#allocation5] sm:$0xff]
        %v536 = vld [vmem:[#allocation5 + $0x8] sm:$0xff]
        %v537 = vld [vmem:[#allocation5 + $0x10] sm:$0xff]
        %v538 = vld [vmem:[#allocation5 + $0x18] sm:$0xff]
        %v539 = vld [vmem:[#allocation5 + $0x20] sm:$0xff]
        %v540 = vld [vmem:[#allocation5 + $0x28] sm:$0xff]
        %v541 = vld [vmem:[#allocation5 + $0x30] sm:$0xff]
        %v542 = vld [vmem:[#allocation5 + $0x38] sm:$0xff]
        %v543 = vld [vmem:[#allocation5 + $0x40] sm:$0xff]
        %v544 = vld [vmem:[#allocation5 + $0x48] sm:$0xff]
        %v545 = vld [vmem:[#allocation5 + $0x50] sm:$0xff]
        %v546 = vld [vmem:[#allocation5 + $0x58] sm:$0xff]
        %v547 = vld [vmem:[#allocation5 + $0x60] sm:$0xff]
        %v548 = vld [vmem:[#allocation5 + $0x68] sm:$0xff]
        %v549 = vld [vmem:[#allocation5 + $0x70] sm:$0xff]
        %v550 = vld [vmem:[#allocation5 + $0x78] sm:$0xff]
        %v551 = vld [vmem:[#allocation5 + $0x80] sm:$0xff]
        %v552 = vld [vmem:[#allocation5 + $0x88] sm:$0xff]
        %v553 = vld [vmem:[#allocation5 + $0x90] sm:$0xff]
        %v554 = vld [vmem:[#allocation5 + $0x98] sm:$0xff]
        %v555 = vld [vmem:[#allocation5 + $0xa0] sm:$0xff]
        %v556 = vld [vmem:[#allocation5 + $0xa8] sm:$0xff]
        %v557 = vld [vmem:[#allocation5 + $0xb0] sm:$0xff]
        %v558 = vld [vmem:[#allocation5 + $0xb8] sm:$0xff]
        %v559 = vld [vmem:[#allocation5 + $0xc0] sm:$0xff]
        %v560 = vld [vmem:[#allocation5 + $0xc8] sm:$0xff]
        %v561 = vld [vmem:[#allocation5 + $0xd0] sm:$0xff]
        %v562 = vld [vmem:[#allocation5 + $0xd8] sm:$0xff]
        %v563 = vld [vmem:[#allocation5 + $0xe0] sm:$0xff]
        %v564 = vld [vmem:[#allocation5 + $0xe8] sm:$0xff]
        %v565 = vld [vmem:[#allocation5 + $0xf0] sm:$0xff]
        %v566 = vld [vmem:[#allocation5 + $0xf8] sm:$0xff]
        %v567 = vld [vmem:[%s2] sm:$0x3]
        %v569 = vlaneseq
        %v570 = vshrl.u32 %v569, 7
        %v571 = vsub.s32 0, %v570
        %v572 = vrot.slane %v567, %v571
        %v573 = vlaneseq
        %v574 = vshrl.u32 %v573, 7
        %v575 = vsub.s32 1, %v574
        %v576 = vrot.slane %v567, %v575
        %v611 = vunpack.c.l.b16 %v535
        %v612 = vunpack.c.h.b16 %v535
        %v613 = vunpack.c.l.b16 %v536
        %v614 = vunpack.c.h.b16 %v536
        %v615 = vunpack.c.l.b16 %v537
        %v616 = vunpack.c.h.b16 %v537
        %v617 = vunpack.c.l.b16 %v538
        %v618 = vunpack.c.h.b16 %v538
        %v619 = vunpack.c.l.b16 %v539
        %v620 = vunpack.c.h.b16 %v539
        %v621 = vunpack.c.l.b16 %v540
        %v622 = vunpack.c.h.b16 %v540
        %v623 = vunpack.c.l.b16 %v541
        %v624 = vunpack.c.h.b16 %v541
        %v625 = vunpack.c.l.b16 %v542
        %v626 = vunpack.c.h.b16 %v542
        %v627 = vunpack.c.l.b16 %v543
        %v628 = vunpack.c.h.b16 %v543
        %v629 = vunpack.c.l.b16 %v544
        %v630 = vunpack.c.h.b16 %v544
        %v631 = vunpack.c.l.b16 %v545
        %v632 = vunpack.c.h.b16 %v545
        %v633 = vunpack.c.l.b16 %v546
        %v634 = vunpack.c.h.b16 %v546
        %v635 = vunpack.c.l.b16 %v547
        %v636 = vunpack.c.h.b16 %v547
        %v637 = vunpack.c.l.b16 %v548
        %v638 = vunpack.c.h.b16 %v548
        %v639 = vunpack.c.l.b16 %v549
        %v640 = vunpack.c.h.b16 %v549
        %v641 = vunpack.c.l.b16 %v550
        %v642 = vunpack.c.h.b16 %v550
        %v643 = vunpack.c.l.b16 %v551
        %v644 = vunpack.c.h.b16 %v551
        %v645 = vunpack.c.l.b16 %v552
        %v646 = vunpack.c.h.b16 %v552
        %v647 = vunpack.c.l.b16 %v553
        %v648 = vunpack.c.h.b16 %v553
        %v649 = vunpack.c.l.b16 %v554
        %v650 = vunpack.c.h.b16 %v554
        %v651 = vunpack.c.l.b16 %v555
        %v652 = vunpack.c.h.b16 %v555
        %v653 = vunpack.c.l.b16 %v556
        %v654 = vunpack.c.h.b16 %v556
        %v655 = vunpack.c.l.b16 %v557
        %v656 = vunpack.c.h.b16 %v557
        %v657 = vunpack.c.l.b16 %v558
        %v658 = vunpack.c.h.b16 %v558
        %v659 = vunpack.c.l.b16 %v559
        %v660 = vunpack.c.h.b16 %v559
        %v661 = vunpack.c.l.b16 %v560
        %v662 = vunpack.c.h.b16 %v560
        %v663 = vunpack.c.l.b16 %v561
        %v664 = vunpack.c.h.b16 %v561
        %v665 = vunpack.c.l.b16 %v562
        %v666 = vunpack.c.h.b16 %v562
        %v667 = vunpack.c.l.b16 %v563
        %v668 = vunpack.c.h.b16 %v563
        %v669 = vunpack.c.l.b16 %v564
        %v670 = vunpack.c.h.b16 %v564
        %v671 = vunpack.c.l.b16 %v565
        %v672 = vunpack.c.h.b16 %v565
        %v673 = vunpack.c.l.b16 %v566
        %v674 = vunpack.c.h.b16 %v566
        %v675 = vpack.c.b16 %v613, %v611
        %v676 = vpack.c.b16 %v614, %v612
        %v677 = vpack.c.b16 %v617, %v615
        %v678 = vpack.c.b16 %v618, %v616
        %v679 = vpack.c.b16 %v621, %v619
        %v680 = vpack.c.b16 %v622, %v620
        %v681 = vpack.c.b16 %v625, %v623
        %v682 = vpack.c.b16 %v626, %v624
        %v683 = vpack.c.b16 %v629, %v627
        %v684 = vpack.c.b16 %v630, %v628
        %v685 = vpack.c.b16 %v633, %v631
        %v686 = vpack.c.b16 %v634, %v632
        %v687 = vpack.c.b16 %v637, %v635
        %v688 = vpack.c.b16 %v638, %v636
        %v689 = vpack.c.b16 %v641, %v639
        %v690 = vpack.c.b16 %v642, %v640
        %v691 = vpack.c.b16 %v645, %v643
        %v692 = vpack.c.b16 %v646, %v644
        %v693 = vpack.c.b16 %v649, %v647
        %v694 = vpack.c.b16 %v650, %v648
        %v695 = vpack.c.b16 %v653, %v651
        %v696 = vpack.c.b16 %v654, %v652
        %v697 = vpack.c.b16 %v657, %v655
        %v698 = vpack.c.b16 %v658, %v656
        %v699 = vpack.c.b16 %v661, %v659
        %v700 = vpack.c.b16 %v662, %v660
        %v701 = vpack.c.b16 %v665, %v663
        %v702 = vpack.c.b16 %v666, %v664
        %v703 = vpack.c.b16 %v669, %v667
        %v704 = vpack.c.b16 %v670, %v668
        %v705 = vpack.c.b16 %v673, %v671
        %v706 = vpack.c.b16 %v674, %v672
        %739 = vmatprep.subr.bf16.mxu0 %v690
        %740 = vmatpush1.bf16.msra.mxu0 %v689
        %741 = vmatprep.subr.bf16.mxu0 %v688
        %742 = vmatpush1.bf16.msra.mxu0 %v687
        %743 = vmatprep.subr.bf16.mxu0 %v686
        %744 = vmatpush1.bf16.msra.mxu0 %v685
        %745 = vmatprep.subr.bf16.mxu0 %v684
        %746 = vmatpush1.bf16.msra.mxu0 %v683
        %747 = vmatprep.subr.bf16.mxu0 %v682
        %748 = vmatpush1.bf16.msra.mxu0 %v681
        %749 = vmatprep.subr.bf16.mxu0 %v680
        %750 = vmatpush1.bf16.msra.mxu0 %v679
        %751 = vmatprep.subr.bf16.mxu0 %v678
        %752 = vmatpush1.bf16.msra.mxu0 %v677
        %753 = vmatprep.subr.bf16.mxu0 %v676
        %754 = vmatpush1.bf16.msra.mxu0 %v675
        %755 = vmatprep.subr.bf16.mxu0 %v706
        %756 = vmatpush2.bf16.msra.mxu0 %v705
        %757 = vmatprep.subr.bf16.mxu0 %v704
        %758 = vmatpush2.bf16.msra.mxu0 %v703
        %759 = vmatprep.subr.bf16.mxu0 %v702
        %760 = vmatpush2.bf16.msra.mxu0 %v701
        %761 = vmatprep.subr.bf16.mxu0 %v700
        %762 = vmatpush2.bf16.msra.mxu0 %v699
        %763 = vmatprep.subr.bf16.mxu0 %v698
        %764 = vmatpush2.bf16.msra.mxu0 %v697
        %765 = vmatprep.subr.bf16.mxu0 %v696
        %766 = vmatpush2.bf16.msra.mxu0 %v695
        %767 = vmatprep.subr.bf16.mxu0 %v694
        %768 = vmatpush2.bf16.msra.mxu0 %v693
        %769 = vmatprep.subr.bf16.mxu0 %v692
        %770 = vmatpush2.bf16.msra.mxu0 %v691
        %771 = vmatprep.mubr.bf16.mxu0 %v472
        %772 = vmatmul.mubr.bf16.gmra.mxu0 %v471
        %v773 = vpop.f32.mrf.mxu0
        %v774 = vadd.f32 %v572, %v773
        %v775 = vpop.f32.mrf.mxu0
        %v776 = vadd.f32 %v576, %v775
        %v777 = vpop.f32.mrf.mxu0
        %v778 = vadd.f32 %v572, %v777
        %v779 = vpop.f32.mrf.mxu0
        %v780 = vadd.f32 %v576, %v779
        %781 = vmatprep.mubr.bf16.mxu0 %v474
        %782 = vmatmul.mubr.bf16.gmra.mxu0 %v473
        %v783 = vpop.f32.mrf.mxu0
        %v784 = vadd.f32 %v572, %v783
        %v785 = vpop.f32.mrf.mxu0
        %v786 = vadd.f32 %v576, %v785
        %v787 = vpop.f32.mrf.mxu0
        %v788 = vadd.f32 %v572, %v787
        %v789 = vpop.f32.mrf.mxu0
        %v790 = vadd.f32 %v576, %v789
        %791 = vmatprep.mubr.bf16.mxu0 %v476
        %792 = vmatmul.mubr.bf16.gmra.mxu0 %v475
        %v793 = vpop.f32.mrf.mxu0
        %v794 = vadd.f32 %v572, %v793
        %v795 = vpop.f32.mrf.mxu0
        %v796 = vadd.f32 %v576, %v795
        %v797 = vpop.f32.mrf.mxu0
        %v798 = vadd.f32 %v572, %v797
        %v799 = vpop.f32.mrf.mxu0
        %v800 = vadd.f32 %v576, %v799
        %801 = vmatprep.mubr.bf16.mxu0 %v478
        %802 = vmatmul.mubr.bf16.gmra.mxu0 %v477
        %v803 = vpop.f32.mrf.mxu0
        %v804 = vadd.f32 %v572, %v803
        %v805 = vpop.f32.mrf.mxu0
        %v806 = vadd.f32 %v576, %v805
        %v807 = vpop.f32.mrf.mxu0
        %v808 = vadd.f32 %v572, %v807
        %v809 = vpop.f32.mrf.mxu0
        %v810 = vadd.f32 %v576, %v809
        %811 = vmatprep.mubr.bf16.mxu0 %v480
        %812 = vmatmul.mubr.bf16.gmra.mxu0 %v479
        %v813 = vpop.f32.mrf.mxu0
        %v814 = vadd.f32 %v572, %v813
        %v815 = vpop.f32.mrf.mxu0
        %v816 = vadd.f32 %v576, %v815
        %v817 = vpop.f32.mrf.mxu0
        %v818 = vadd.f32 %v572, %v817
        %v819 = vpop.f32.mrf.mxu0
        %v820 = vadd.f32 %v576, %v819
        %821 = vmatprep.mubr.bf16.mxu0 %v482
        %822 = vmatmul.mubr.bf16.gmra.mxu0 %v481
        %v823 = vpop.f32.mrf.mxu0
        %v824 = vadd.f32 %v572, %v823
        %v825 = vpop.f32.mrf.mxu0
        %v826 = vadd.f32 %v576, %v825
        %v827 = vpop.f32.mrf.mxu0
        %v828 = vadd.f32 %v572, %v827
        %v829 = vpop.f32.mrf.mxu0
        %v830 = vadd.f32 %v576, %v829
        %831 = vmatprep.mubr.bf16.mxu0 %v484
        %832 = vmatmul.mubr.bf16.gmra.mxu0 %v483
        %v833 = vpop.f32.mrf.mxu0
        %v834 = vadd.f32 %v572, %v833
        %v835 = vpop.f32.mrf.mxu0
        %v836 = vadd.f32 %v576, %v835
        %v837 = vpop.f32.mrf.mxu0
        %v838 = vadd.f32 %v572, %v837
        %v839 = vpop.f32.mrf.mxu0
        %v840 = vadd.f32 %v576, %v839
        %841 = vmatprep.mubr.bf16.mxu0 %v486
        %842 = vmatmul.mubr.bf16.gmra.mxu0 %v485
        %v843 = vpop.f32.mrf.mxu0
        %v844 = vadd.f32 %v572, %v843
        %v845 = vpop.f32.mrf.mxu0
        %v846 = vadd.f32 %v576, %v845
        %v847 = vpop.f32.mrf.mxu0
        %v848 = vadd.f32 %v572, %v847
        %v849 = vpop.f32.mrf.mxu0
        %v850 = vadd.f32 %v576, %v849
        %851 = vmatprep.mubr.bf16.mxu0 %v488
        %852 = vmatmul.mubr.bf16.gmra.mxu0 %v487
        %v853 = vpop.f32.mrf.mxu0
        %v854 = vadd.f32 %v572, %v853
        %v855 = vpop.f32.mrf.mxu0
        %v856 = vadd.f32 %v576, %v855
        %v857 = vpop.f32.mrf.mxu0
        %v858 = vadd.f32 %v572, %v857
        %v859 = vpop.f32.mrf.mxu0
        %v860 = vadd.f32 %v576, %v859
        %861 = vmatprep.mubr.bf16.mxu0 %v490
        %862 = vmatmul.mubr.bf16.gmra.mxu0 %v489
        %v863 = vpop.f32.mrf.mxu0
        %v864 = vadd.f32 %v572, %v863
        %v865 = vpop.f32.mrf.mxu0
        %v866 = vadd.f32 %v576, %v865
        %v867 = vpop.f32.mrf.mxu0
        %v868 = vadd.f32 %v572, %v867
        %v869 = vpop.f32.mrf.mxu0
        %v870 = vadd.f32 %v576, %v869
        %871 = vmatprep.mubr.bf16.mxu0 %v492
        %872 = vmatmul.mubr.bf16.gmra.mxu0 %v491
        %v873 = vpop.f32.mrf.mxu0
        %v874 = vadd.f32 %v572, %v873
        %v875 = vpop.f32.mrf.mxu0
        %v876 = vadd.f32 %v576, %v875
        %v877 = vpop.f32.mrf.mxu0
        %v878 = vadd.f32 %v572, %v877
        %v879 = vpop.f32.mrf.mxu0
        %v880 = vadd.f32 %v576, %v879
        %881 = vmatprep.mubr.bf16.mxu0 %v494
        %882 = vmatmul.mubr.bf16.gmra.mxu0 %v493
        %v883 = vpop.f32.mrf.mxu0
        %v884 = vadd.f32 %v572, %v883
        %v885 = vpop.f32.mrf.mxu0
        %v886 = vadd.f32 %v576, %v885
        %v887 = vpop.f32.mrf.mxu0
        %v888 = vadd.f32 %v572, %v887
        %v889 = vpop.f32.mrf.mxu0
        %v890 = vadd.f32 %v576, %v889
        %891 = vmatprep.mubr.bf16.mxu0 %v496
        %892 = vmatmul.mubr.bf16.gmra.mxu0 %v495
        %v893 = vpop.f32.mrf.mxu0
        %v894 = vadd.f32 %v572, %v893
        %v895 = vpop.f32.mrf.mxu0
        %v896 = vadd.f32 %v576, %v895
        %v897 = vpop.f32.mrf.mxu0
        %v898 = vadd.f32 %v572, %v897
        %v899 = vpop.f32.mrf.mxu0
        %v900 = vadd.f32 %v576, %v899
        %901 = vmatprep.mubr.bf16.mxu0 %v498
        %902 = vmatmul.mubr.bf16.gmra.mxu0 %v497
        %v903 = vpop.f32.mrf.mxu0
        %v904 = vadd.f32 %v572, %v903
        %v905 = vpop.f32.mrf.mxu0
        %v906 = vadd.f32 %v576, %v905
        %v907 = vpop.f32.mrf.mxu0
        %v908 = vadd.f32 %v572, %v907
        %v909 = vpop.f32.mrf.mxu0
        %v910 = vadd.f32 %v576, %v909
        %911 = vmatprep.mubr.bf16.mxu0 %v500
        %912 = vmatmul.mubr.bf16.gmra.mxu0 %v499
        %v913 = vpop.f32.mrf.mxu0
        %v914 = vadd.f32 %v572, %v913
        %v915 = vpop.f32.mrf.mxu0
        %v916 = vadd.f32 %v576, %v915
        %v917 = vpop.f32.mrf.mxu0
        %v918 = vadd.f32 %v572, %v917
        %v919 = vpop.f32.mrf.mxu0
        %v920 = vadd.f32 %v576, %v919
        %921 = vmatprep.mubr.bf16.mxu0 %v502
        %922 = vmatmul.mubr.bf16.gmra.mxu0 %v501
        %v923 = vpop.f32.mrf.mxu0
        %v924 = vadd.f32 %v572, %v923
        %v925 = vpop.f32.mrf.mxu0
        %v926 = vadd.f32 %v576, %v925
        %v927 = vpop.f32.mrf.mxu0
        %v928 = vadd.f32 %v572, %v927
        %v929 = vpop.f32.mrf.mxu0
        %v930 = vadd.f32 %v576, %v929
        %931 = vmatprep.mubr.bf16.mxu0 %v504
        %932 = vmatmul.mubr.bf16.gmra.mxu0 %v503
        %v933 = vpop.f32.mrf.mxu0
        %v934 = vadd.f32 %v572, %v933
        %v935 = vpop.f32.mrf.mxu0
        %v936 = vadd.f32 %v576, %v935
        %v937 = vpop.f32.mrf.mxu0
        %v938 = vadd.f32 %v572, %v937
        %v939 = vpop.f32.mrf.mxu0
        %v940 = vadd.f32 %v576, %v939
        %941 = vmatprep.mubr.bf16.mxu0 %v506
        %942 = vmatmul.mubr.bf16.gmra.mxu0 %v505
        %v943 = vpop.f32.mrf.mxu0
        %v944 = vadd.f32 %v572, %v943
        %v945 = vpop.f32.mrf.mxu0
        %v946 = vadd.f32 %v576, %v945
        %v947 = vpop.f32.mrf.mxu0
        %v948 = vadd.f32 %v572, %v947
        %v949 = vpop.f32.mrf.mxu0
        %v950 = vadd.f32 %v576, %v949
        %951 = vmatprep.mubr.bf16.mxu0 %v508
        %952 = vmatmul.mubr.bf16.gmra.mxu0 %v507
        %v953 = vpop.f32.mrf.mxu0
        %v954 = vadd.f32 %v572, %v953
        %v955 = vpop.f32.mrf.mxu0
        %v956 = vadd.f32 %v576, %v955
        %v957 = vpop.f32.mrf.mxu0
        %v958 = vadd.f32 %v572, %v957
        %v959 = vpop.f32.mrf.mxu0
        %v960 = vadd.f32 %v576, %v959
        %961 = vmatprep.mubr.bf16.mxu0 %v510
        %962 = vmatmul.mubr.bf16.gmra.mxu0 %v509
        %v963 = vpop.f32.mrf.mxu0
        %v964 = vadd.f32 %v572, %v963
        %v965 = vpop.f32.mrf.mxu0
        %v966 = vadd.f32 %v576, %v965
        %v967 = vpop.f32.mrf.mxu0
        %v968 = vadd.f32 %v572, %v967
        %v969 = vpop.f32.mrf.mxu0
        %v970 = vadd.f32 %v576, %v969
        %971 = vmatprep.mubr.bf16.mxu0 %v512
        %972 = vmatmul.mubr.bf16.gmra.mxu0 %v511
        %v973 = vpop.f32.mrf.mxu0
        %v974 = vadd.f32 %v572, %v973
        %v975 = vpop.f32.mrf.mxu0
        %v976 = vadd.f32 %v576, %v975
        %v977 = vpop.f32.mrf.mxu0
        %v978 = vadd.f32 %v572, %v977
        %v979 = vpop.f32.mrf.mxu0
        %v980 = vadd.f32 %v576, %v979
        %981 = vmatprep.mubr.bf16.mxu0 %v514
        %982 = vmatmul.mubr.bf16.gmra.mxu0 %v513
        %v983 = vpop.f32.mrf.mxu0
        %v984 = vadd.f32 %v572, %v983
        %v985 = vpop.f32.mrf.mxu0
        %v986 = vadd.f32 %v576, %v985
        %v987 = vpop.f32.mrf.mxu0
        %v988 = vadd.f32 %v572, %v987
        %v989 = vpop.f32.mrf.mxu0
        %v990 = vadd.f32 %v576, %v989
        %991 = vmatprep.mubr.bf16.mxu0 %v516
        %992 = vmatmul.mubr.bf16.gmra.mxu0 %v515
        %v993 = vpop.f32.mrf.mxu0
        %v994 = vadd.f32 %v572, %v993
        %v995 = vpop.f32.mrf.mxu0
        %v996 = vadd.f32 %v576, %v995
        %v997 = vpop.f32.mrf.mxu0
        %v998 = vadd.f32 %v572, %v997
        %v999 = vpop.f32.mrf.mxu0
        %v1000 = vadd.f32 %v576, %v999
        %1001 = vmatprep.mubr.bf16.mxu0 %v518
        %1002 = vmatmul.mubr.bf16.gmra.mxu0 %v517
        %v1003 = vpop.f32.mrf.mxu0
        %v1004 = vadd.f32 %v572, %v1003
        %v1005 = vpop.f32.mrf.mxu0
        %v1006 = vadd.f32 %v576, %v1005
        %v1007 = vpop.f32.mrf.mxu0
        %v1008 = vadd.f32 %v572, %v1007
        %v1009 = vpop.f32.mrf.mxu0
        %v1010 = vadd.f32 %v576, %v1009
        %1011 = vmatprep.mubr.bf16.mxu0 %v520
        %1012 = vmatmul.mubr.bf16.gmra.mxu0 %v519
        %v1013 = vpop.f32.mrf.mxu0
        %v1014 = vadd.f32 %v572, %v1013
        %v1015 = vpop.f32.mrf.mxu0
        %v1016 = vadd.f32 %v576, %v1015
        %v1017 = vpop.f32.mrf.mxu0
        %v1018 = vadd.f32 %v572, %v1017
        %v1019 = vpop.f32.mrf.mxu0
        %v1020 = vadd.f32 %v576, %v1019
        %1021 = vmatprep.mubr.bf16.mxu0 %v522
        %1022 = vmatmul.mubr.bf16.gmra.mxu0 %v521
        %v1023 = vpop.f32.mrf.mxu0
        %v1024 = vadd.f32 %v572, %v1023
        %v1025 = vpop.f32.mrf.mxu0
        %v1026 = vadd.f32 %v576, %v1025
        %v1027 = vpop.f32.mrf.mxu0
        %v1028 = vadd.f32 %v572, %v1027
        %v1029 = vpop.f32.mrf.mxu0
        %v1030 = vadd.f32 %v576, %v1029
        %1031 = vmatprep.mubr.bf16.mxu0 %v524
        %1032 = vmatmul.mubr.bf16.gmra.mxu0 %v523
        %v1033 = vpop.f32.mrf.mxu0
        %v1034 = vadd.f32 %v572, %v1033
        %v1035 = vpop.f32.mrf.mxu0
        %v1036 = vadd.f32 %v576, %v1035
        %v1037 = vpop.f32.mrf.mxu0
        %v1038 = vadd.f32 %v572, %v1037
        %v1039 = vpop.f32.mrf.mxu0
        %v1040 = vadd.f32 %v576, %v1039
        %1041 = vmatprep.mubr.bf16.mxu0 %v526
        %1042 = vmatmul.mubr.bf16.gmra.mxu0 %v525
        %v1043 = vpop.f32.mrf.mxu0
        %v1044 = vadd.f32 %v572, %v1043
        %v1045 = vpop.f32.mrf.mxu0
        %v1046 = vadd.f32 %v576, %v1045
        %v1047 = vpop.f32.mrf.mxu0
        %v1048 = vadd.f32 %v572, %v1047
        %v1049 = vpop.f32.mrf.mxu0
        %v1050 = vadd.f32 %v576, %v1049
        %1051 = vmatprep.mubr.bf16.mxu0 %v528
        %1052 = vmatmul.mubr.bf16.gmra.mxu0 %v527
        %v1053 = vpop.f32.mrf.mxu0
        %v1054 = vadd.f32 %v572, %v1053
        %v1055 = vpop.f32.mrf.mxu0
        %v1056 = vadd.f32 %v576, %v1055
        %v1057 = vpop.f32.mrf.mxu0
        %v1058 = vadd.f32 %v572, %v1057
        %v1059 = vpop.f32.mrf.mxu0
        %v1060 = vadd.f32 %v576, %v1059
        %1061 = vmatprep.mubr.bf16.mxu0 %v530
        %1062 = vmatmul.mubr.bf16.gmra.mxu0 %v529
        %v1063 = vpop.f32.mrf.mxu0
        %v1064 = vadd.f32 %v572, %v1063
        %v1065 = vpop.f32.mrf.mxu0
        %v1066 = vadd.f32 %v576, %v1065
        %v1067 = vpop.f32.mrf.mxu0
        %v1068 = vadd.f32 %v572, %v1067
        %v1069 = vpop.f32.mrf.mxu0
        %v1070 = vadd.f32 %v576, %v1069
        %1071 = vmatprep.mubr.bf16.mxu0 %v532
        %1072 = vmatmul.mubr.bf16.gmra.mxu0 %v531
        %v1073 = vpop.f32.mrf.mxu0
        %v1074 = vadd.f32 %v572, %v1073
        %v1075 = vpop.f32.mrf.mxu0
        %v1076 = vadd.f32 %v576, %v1075
        %v1077 = vpop.f32.mrf.mxu0
        %v1078 = vadd.f32 %v572, %v1077
        %v1079 = vpop.f32.mrf.mxu0
        %v1080 = vadd.f32 %v576, %v1079
        %1081 = vmatprep.mubr.bf16.mxu0 %v534
        %1082 = vmatmul.mubr.bf16.gmra.mxu0 %v533
        %v1083 = vpop.f32.mrf.mxu0
        %v1084 = vadd.f32 %v572, %v1083
        %v1085 = vpop.f32.mrf.mxu0
        %v1086 = vadd.f32 %v576, %v1085
        %v1087 = vpop.f32.mrf.mxu0
        %v1088 = vadd.f32 %v572, %v1087
        %v1089 = vpop.f32.mrf.mxu0
        %v1090 = vadd.f32 %v576, %v1089
        %1091 = vdwg.mxu0
        %v1092 = vmax.f32 %v774, 0.0
        %v1093 = vmax.f32 %v776, 0.0
        %v1094 = vmax.f32 %v778, 0.0
        %v1095 = vmax.f32 %v780, 0.0
        %v1096 = vmax.f32 %v784, 0.0
        %v1097 = vmax.f32 %v786, 0.0
        %v1098 = vmax.f32 %v788, 0.0
        %v1099 = vmax.f32 %v790, 0.0
        %v1100 = vmax.f32 %v794, 0.0
        %v1101 = vmax.f32 %v796, 0.0
        %v1102 = vmax.f32 %v798, 0.0
        %v1103 = vmax.f32 %v800, 0.0
        %v1104 = vmax.f32 %v804, 0.0
        %v1105 = vmax.f32 %v806, 0.0
        %v1106 = vmax.f32 %v808, 0.0
        %v1107 = vmax.f32 %v810, 0.0
        %v1108 = vmax.f32 %v814, 0.0
        %v1109 = vmax.f32 %v816, 0.0
        %v1110 = vmax.f32 %v818, 0.0
        %v1111 = vmax.f32 %v820, 0.0
        %v1112 = vmax.f32 %v824, 0.0
        %v1113 = vmax.f32 %v826, 0.0
        %v1114 = vmax.f32 %v828, 0.0
        %v1115 = vmax.f32 %v830, 0.0
        %v1116 = vmax.f32 %v834, 0.0
        %v1117 = vmax.f32 %v836, 0.0
        %v1118 = vmax.f32 %v838, 0.0
        %v1119 = vmax.f32 %v840, 0.0
        %v1120 = vmax.f32 %v844, 0.0
        %v1121 = vmax.f32 %v846, 0.0
        %v1122 = vmax.f32 %v848, 0.0
        %v1123 = vmax.f32 %v850, 0.0
        %v1124 = vmax.f32 %v854, 0.0
        %v1125 = vmax.f32 %v856, 0.0
        %v1126 = vmax.f32 %v858, 0.0
        %v1127 = vmax.f32 %v860, 0.0
        %v1128 = vmax.f32 %v864, 0.0
        %v1129 = vmax.f32 %v866, 0.0
        %v1130 = vmax.f32 %v868, 0.0
        %v1131 = vmax.f32 %v870, 0.0
        %v1132 = vmax.f32 %v874, 0.0
        %v1133 = vmax.f32 %v876, 0.0
        %v1134 = vmax.f32 %v878, 0.0
        %v1135 = vmax.f32 %v880, 0.0
        %v1136 = vmax.f32 %v884, 0.0
        %v1137 = vmax.f32 %v886, 0.0
        %v1138 = vmax.f32 %v888, 0.0
        %v1139 = vmax.f32 %v890, 0.0
        %v1140 = vmax.f32 %v894, 0.0
        %v1141 = vmax.f32 %v896, 0.0
        %v1142 = vmax.f32 %v898, 0.0
        %v1143 = vmax.f32 %v900, 0.0
        %v1144 = vmax.f32 %v904, 0.0
        %v1145 = vmax.f32 %v906, 0.0
        %v1146 = vmax.f32 %v908, 0.0
        %v1147 = vmax.f32 %v910, 0.0
        %v1148 = vmax.f32 %v914, 0.0
        %v1149 = vmax.f32 %v916, 0.0
        %v1150 = vmax.f32 %v918, 0.0
        %v1151 = vmax.f32 %v920, 0.0
        %v1152 = vmax.f32 %v924, 0.0
        %v1153 = vmax.f32 %v926, 0.0
        %v1154 = vmax.f32 %v928, 0.0
        %v1155 = vmax.f32 %v930, 0.0
        %v1156 = vmax.f32 %v934, 0.0
        %v1157 = vmax.f32 %v936, 0.0
        %v1158 = vmax.f32 %v938, 0.0
        %v1159 = vmax.f32 %v940, 0.0
        %v1160 = vmax.f32 %v944, 0.0
        %v1161 = vmax.f32 %v946, 0.0
        %v1162 = vmax.f32 %v948, 0.0
        %v1163 = vmax.f32 %v950, 0.0
        %v1164 = vmax.f32 %v954, 0.0
        %v1165 = vmax.f32 %v956, 0.0
        %v1166 = vmax.f32 %v958, 0.0
        %v1167 = vmax.f32 %v960, 0.0
        %v1168 = vmax.f32 %v964, 0.0
        %v1169 = vmax.f32 %v966, 0.0
        %v1170 = vmax.f32 %v968, 0.0
        %v1171 = vmax.f32 %v970, 0.0
        %v1172 = vmax.f32 %v974, 0.0
        %v1173 = vmax.f32 %v976, 0.0
        %v1174 = vmax.f32 %v978, 0.0
        %v1175 = vmax.f32 %v980, 0.0
        %v1176 = vmax.f32 %v984, 0.0
        %v1177 = vmax.f32 %v986, 0.0
        %v1178 = vmax.f32 %v988, 0.0
        %v1179 = vmax.f32 %v990, 0.0
        %v1180 = vmax.f32 %v994, 0.0
        %v1181 = vmax.f32 %v996, 0.0
        %v1182 = vmax.f32 %v998, 0.0
        %v1183 = vmax.f32 %v1000, 0.0
        %v1184 = vmax.f32 %v1004, 0.0
        %v1185 = vmax.f32 %v1006, 0.0
        %v1186 = vmax.f32 %v1008, 0.0
        %v1187 = vmax.f32 %v1010, 0.0
        %v1188 = vmax.f32 %v1014, 0.0
        %v1189 = vmax.f32 %v1016, 0.0
        %v1190 = vmax.f32 %v1018, 0.0
        %v1191 = vmax.f32 %v1020, 0.0
        %v1192 = vmax.f32 %v1024, 0.0
        %v1193 = vmax.f32 %v1026, 0.0
        %v1194 = vmax.f32 %v1028, 0.0
        %v1195 = vmax.f32 %v1030, 0.0
        %v1196 = vmax.f32 %v1034, 0.0
        %v1197 = vmax.f32 %v1036, 0.0
        %v1198 = vmax.f32 %v1038, 0.0
        %v1199 = vmax.f32 %v1040, 0.0
        %v1200 = vmax.f32 %v1044, 0.0
        %v1201 = vmax.f32 %v1046, 0.0
        %v1202 = vmax.f32 %v1048, 0.0
        %v1203 = vmax.f32 %v1050, 0.0
        %v1204 = vmax.f32 %v1054, 0.0
        %v1205 = vmax.f32 %v1056, 0.0
        %v1206 = vmax.f32 %v1058, 0.0
        %v1207 = vmax.f32 %v1060, 0.0
        %v1208 = vmax.f32 %v1064, 0.0
        %v1209 = vmax.f32 %v1066, 0.0
        %v1210 = vmax.f32 %v1068, 0.0
        %v1211 = vmax.f32 %v1070, 0.0
        %v1212 = vmax.f32 %v1074, 0.0
        %v1213 = vmax.f32 %v1076, 0.0
        %v1214 = vmax.f32 %v1078, 0.0
        %v1215 = vmax.f32 %v1080, 0.0
        %v1216 = vmax.f32 %v1084, 0.0
        %v1217 = vmax.f32 %v1086, 0.0
        %v1218 = vmax.f32 %v1088, 0.0
        %v1219 = vmax.f32 %v1090, 0.0
        %v1220 = vpack.c.bf16 %v1094, %v1092
        %v1221 = vpack.c.bf16 %v1095, %v1093
        %v1222 = vpack.c.bf16 %v1098, %v1096
        %v1223 = vpack.c.bf16 %v1099, %v1097
        %v1224 = vpack.c.bf16 %v1102, %v1100
        %v1225 = vpack.c.bf16 %v1103, %v1101
        %v1226 = vpack.c.bf16 %v1106, %v1104
        %v1227 = vpack.c.bf16 %v1107, %v1105
        %v1228 = vpack.c.bf16 %v1110, %v1108
        %v1229 = vpack.c.bf16 %v1111, %v1109
        %v1230 = vpack.c.bf16 %v1114, %v1112
        %v1231 = vpack.c.bf16 %v1115, %v1113
        %v1232 = vpack.c.bf16 %v1118, %v1116
        %v1233 = vpack.c.bf16 %v1119, %v1117
        %v1234 = vpack.c.bf16 %v1122, %v1120
        %v1235 = vpack.c.bf16 %v1123, %v1121
        %v1236 = vpack.c.bf16 %v1126, %v1124
        %v1237 = vpack.c.bf16 %v1127, %v1125
        %v1238 = vpack.c.bf16 %v1130, %v1128
        %v1239 = vpack.c.bf16 %v1131, %v1129
        %v1240 = vpack.c.bf16 %v1134, %v1132
        %v1241 = vpack.c.bf16 %v1135, %v1133
        %v1242 = vpack.c.bf16 %v1138, %v1136
        %v1243 = vpack.c.bf16 %v1139, %v1137
        %v1244 = vpack.c.bf16 %v1142, %v1140
        %v1245 = vpack.c.bf16 %v1143, %v1141
        %v1246 = vpack.c.bf16 %v1146, %v1144
        %v1247 = vpack.c.bf16 %v1147, %v1145
        %v1248 = vpack.c.bf16 %v1150, %v1148
        %v1249 = vpack.c.bf16 %v1151, %v1149
        %v1250 = vpack.c.bf16 %v1154, %v1152
        %v1251 = vpack.c.bf16 %v1155, %v1153
        %v1252 = vpack.c.bf16 %v1158, %v1156
        %v1253 = vpack.c.bf16 %v1159, %v1157
        %v1254 = vpack.c.bf16 %v1162, %v1160
        %v1255 = vpack.c.bf16 %v1163, %v1161
        %v1256 = vpack.c.bf16 %v1166, %v1164
        %v1257 = vpack.c.bf16 %v1167, %v1165
        %v1258 = vpack.c.bf16 %v1170, %v1168
        %v1259 = vpack.c.bf16 %v1171, %v1169
        %v1260 = vpack.c.bf16 %v1174, %v1172
        %v1261 = vpack.c.bf16 %v1175, %v1173
        %v1262 = vpack.c.bf16 %v1178, %v1176
        %v1263 = vpack.c.bf16 %v1179, %v1177
        %v1264 = vpack.c.bf16 %v1182, %v1180
        %v1265 = vpack.c.bf16 %v1183, %v1181
        %v1266 = vpack.c.bf16 %v1186, %v1184
        %v1267 = vpack.c.bf16 %v1187, %v1185
        %v1268 = vpack.c.bf16 %v1190, %v1188
        %v1269 = vpack.c.bf16 %v1191, %v1189
        %v1270 = vpack.c.bf16 %v1194, %v1192
        %v1271 = vpack.c.bf16 %v1195, %v1193
        %v1272 = vpack.c.bf16 %v1198, %v1196
        %v1273 = vpack.c.bf16 %v1199, %v1197
        %v1274 = vpack.c.bf16 %v1202, %v1200
        %v1275 = vpack.c.bf16 %v1203, %v1201
        %v1276 = vpack.c.bf16 %v1206, %v1204
        %v1277 = vpack.c.bf16 %v1207, %v1205
        %v1278 = vpack.c.bf16 %v1210, %v1208
        %v1279 = vpack.c.bf16 %v1211, %v1209
        %v1280 = vpack.c.bf16 %v1214, %v1212
        %v1281 = vpack.c.bf16 %v1215, %v1213
        %v1282 = vpack.c.bf16 %v1218, %v1216
        %v1283 = vpack.c.bf16 %v1219, %v1217
        %v1284 = vld [vmem:[#allocation7] sm:$0xff]
        %v1285 = vld [vmem:[#allocation7 + $0x8] sm:$0xff]
        %v1286 = vld [vmem:[#allocation7 + $0x10] sm:$0xff]
        %v1287 = vld [vmem:[#allocation7 + $0x18] sm:$0xff]
        %v1288 = vld [vmem:[#allocation7 + $0x20] sm:$0xff]
        %v1289 = vld [vmem:[#allocation7 + $0x28] sm:$0xff]
        %v1290 = vld [vmem:[#allocation7 + $0x30] sm:$0xff]
        %v1291 = vld [vmem:[#allocation7 + $0x38] sm:$0xff]
        %v1292 = vld [vmem:[#allocation7 + $0x40] sm:$0xff]
        %v1293 = vld [vmem:[#allocation7 + $0x48] sm:$0xff]
        %v1294 = vld [vmem:[#allocation7 + $0x50] sm:$0xff]
        %v1295 = vld [vmem:[#allocation7 + $0x58] sm:$0xff]
        %v1296 = vld [vmem:[#allocation7 + $0x60] sm:$0xff]
        %v1297 = vld [vmem:[#allocation7 + $0x68] sm:$0xff]
        %v1298 = vld [vmem:[#allocation7 + $0x70] sm:$0xff]
        %v1299 = vld [vmem:[#allocation7 + $0x78] sm:$0xff]
        %v1300 = vld [vmem:[#allocation7 + $0x80] sm:$0xff]
        %v1301 = vld [vmem:[#allocation7 + $0x88] sm:$0xff]
        %v1302 = vld [vmem:[#allocation7 + $0x90] sm:$0xff]
        %v1303 = vld [vmem:[#allocation7 + $0x98] sm:$0xff]
        %v1304 = vld [vmem:[#allocation7 + $0xa0] sm:$0xff]
        %v1305 = vld [vmem:[#allocation7 + $0xa8] sm:$0xff]
        %v1306 = vld [vmem:[#allocation7 + $0xb0] sm:$0xff]
        %v1307 = vld [vmem:[#allocation7 + $0xb8] sm:$0xff]
        %v1308 = vld [vmem:[#allocation7 + $0xc0] sm:$0xff]
        %v1309 = vld [vmem:[#allocation7 + $0xc8] sm:$0xff]
        %v1310 = vld [vmem:[#allocation7 + $0xd0] sm:$0xff]
        %v1311 = vld [vmem:[#allocation7 + $0xd8] sm:$0xff]
        %v1312 = vld [vmem:[#allocation7 + $0xe0] sm:$0xff]
        %v1313 = vld [vmem:[#allocation7 + $0xe8] sm:$0xff]
        %v1314 = vld [vmem:[#allocation7 + $0xf0] sm:$0xff]
        %v1315 = vld [vmem:[#allocation7 + $0xf8] sm:$0xff]
        %v1316 = vld [vmem:[%s4] sm:$0x3]
        %v1318 = vlaneseq
        %v1319 = vshrl.u32 %v1318, 7
        %v1320 = vsub.s32 0, %v1319
        %v1321 = vrot.slane %v1316, %v1320
        %v1322 = vlaneseq
        %v1323 = vshrl.u32 %v1322, 7
        %v1324 = vsub.s32 1, %v1323
        %v1325 = vrot.slane %v1316, %v1324
        %v1360 = vunpack.c.l.b16 %v1284
        %v1361 = vunpack.c.h.b16 %v1284
        %v1362 = vunpack.c.l.b16 %v1285
        %v1363 = vunpack.c.h.b16 %v1285
        %v1364 = vunpack.c.l.b16 %v1286
        %v1365 = vunpack.c.h.b16 %v1286
        %v1366 = vunpack.c.l.b16 %v1287
        %v1367 = vunpack.c.h.b16 %v1287
        %v1368 = vunpack.c.l.b16 %v1288
        %v1369 = vunpack.c.h.b16 %v1288
        %v1370 = vunpack.c.l.b16 %v1289
        %v1371 = vunpack.c.h.b16 %v1289
        %v1372 = vunpack.c.l.b16 %v1290
        %v1373 = vunpack.c.h.b16 %v1290
        %v1374 = vunpack.c.l.b16 %v1291
        %v1375 = vunpack.c.h.b16 %v1291
        %v1376 = vunpack.c.l.b16 %v1292
        %v1377 = vunpack.c.h.b16 %v1292
        %v1378 = vunpack.c.l.b16 %v1293
        %v1379 = vunpack.c.h.b16 %v1293
        %v1380 = vunpack.c.l.b16 %v1294
        %v1381 = vunpack.c.h.b16 %v1294
        %v1382 = vunpack.c.l.b16 %v1295
        %v1383 = vunpack.c.h.b16 %v1295
        %v1384 = vunpack.c.l.b16 %v1296
        %v1385 = vunpack.c.h.b16 %v1296
        %v1386 = vunpack.c.l.b16 %v1297
        %v1387 = vunpack.c.h.b16 %v1297
        %v1388 = vunpack.c.l.b16 %v1298
        %v1389 = vunpack.c.h.b16 %v1298
        %v1390 = vunpack.c.l.b16 %v1299
        %v1391 = vunpack.c.h.b16 %v1299
        %v1392 = vunpack.c.l.b16 %v1300
        %v1393 = vunpack.c.h.b16 %v1300
        %v1394 = vunpack.c.l.b16 %v1301
        %v1395 = vunpack.c.h.b16 %v1301
        %v1396 = vunpack.c.l.b16 %v1302
        %v1397 = vunpack.c.h.b16 %v1302
        %v1398 = vunpack.c.l.b16 %v1303
        %v1399 = vunpack.c.h.b16 %v1303
        %v1400 = vunpack.c.l.b16 %v1304
        %v1401 = vunpack.c.h.b16 %v1304
        %v1402 = vunpack.c.l.b16 %v1305
        %v1403 = vunpack.c.h.b16 %v1305
        %v1404 = vunpack.c.l.b16 %v1306
        %v1405 = vunpack.c.h.b16 %v1306
        %v1406 = vunpack.c.l.b16 %v1307
        %v1407 = vunpack.c.h.b16 %v1307
        %v1408 = vunpack.c.l.b16 %v1308
        %v1409 = vunpack.c.h.b16 %v1308
        %v1410 = vunpack.c.l.b16 %v1309
        %v1411 = vunpack.c.h.b16 %v1309
        %v1412 = vunpack.c.l.b16 %v1310
        %v1413 = vunpack.c.h.b16 %v1310
        %v1414 = vunpack.c.l.b16 %v1311
        %v1415 = vunpack.c.h.b16 %v1311
        %v1416 = vunpack.c.l.b16 %v1312
        %v1417 = vunpack.c.h.b16 %v1312
        %v1418 = vunpack.c.l.b16 %v1313
        %v1419 = vunpack.c.h.b16 %v1313
        %v1420 = vunpack.c.l.b16 %v1314
        %v1421 = vunpack.c.h.b16 %v1314
        %v1422 = vunpack.c.l.b16 %v1315
        %v1423 = vunpack.c.h.b16 %v1315
        %v1424 = vpack.c.b16 %v1362, %v1360
        %v1425 = vpack.c.b16 %v1363, %v1361
        %v1426 = vpack.c.b16 %v1366, %v1364
        %v1427 = vpack.c.b16 %v1367, %v1365
        %v1428 = vpack.c.b16 %v1370, %v1368
        %v1429 = vpack.c.b16 %v1371, %v1369
        %v1430 = vpack.c.b16 %v1374, %v1372
        %v1431 = vpack.c.b16 %v1375, %v1373
        %v1432 = vpack.c.b16 %v1378, %v1376
        %v1433 = vpack.c.b16 %v1379, %v1377
        %v1434 = vpack.c.b16 %v1382, %v1380
        %v1435 = vpack.c.b16 %v1383, %v1381
        %v1436 = vpack.c.b16 %v1386, %v1384
        %v1437 = vpack.c.b16 %v1387, %v1385
        %v1438 = vpack.c.b16 %v1390, %v1388
        %v1439 = vpack.c.b16 %v1391, %v1389
        %v1440 = vpack.c.b16 %v1394, %v1392
        %v1441 = vpack.c.b16 %v1395, %v1393
        %v1442 = vpack.c.b16 %v1398, %v1396
        %v1443 = vpack.c.b16 %v1399, %v1397
        %v1444 = vpack.c.b16 %v1402, %v1400
        %v1445 = vpack.c.b16 %v1403, %v1401
        %v1446 = vpack.c.b16 %v1406, %v1404
        %v1447 = vpack.c.b16 %v1407, %v1405
        %v1448 = vpack.c.b16 %v1410, %v1408
        %v1449 = vpack.c.b16 %v1411, %v1409
        %v1450 = vpack.c.b16 %v1414, %v1412
        %v1451 = vpack.c.b16 %v1415, %v1413
        %v1452 = vpack.c.b16 %v1418, %v1416
        %v1453 = vpack.c.b16 %v1419, %v1417
        %v1454 = vpack.c.b16 %v1422, %v1420
        %v1455 = vpack.c.b16 %v1423, %v1421
        %1488 = vmatprep.subr.bf16.mxu0 %v1439
        %1489 = vmatpush1.bf16.msra.mxu0 %v1438
        %1490 = vmatprep.subr.bf16.mxu0 %v1437
        %1491 = vmatpush1.bf16.msra.mxu0 %v1436
        %1492 = vmatprep.subr.bf16.mxu0 %v1435
        %1493 = vmatpush1.bf16.msra.mxu0 %v1434
        %1494 = vmatprep.subr.bf16.mxu0 %v1433
        %1495 = vmatpush1.bf16.msra.mxu0 %v1432
        %1496 = vmatprep.subr.bf16.mxu0 %v1431
        %1497 = vmatpush1.bf16.msra.mxu0 %v1430
        %1498 = vmatprep.subr.bf16.mxu0 %v1429
        %1499 = vmatpush1.bf16.msra.mxu0 %v1428
        %1500 = vmatprep.subr.bf16.mxu0 %v1427
        %1501 = vmatpush1.bf16.msra.mxu0 %v1426
        %1502 = vmatprep.subr.bf16.mxu0 %v1425
        %1503 = vmatpush1.bf16.msra.mxu0 %v1424
        %1504 = vmatprep.subr.bf16.mxu0 %v1455
        %1505 = vmatpush2.bf16.msra.mxu0 %v1454
        %1506 = vmatprep.subr.bf16.mxu0 %v1453
        %1507 = vmatpush2.bf16.msra.mxu0 %v1452
        %1508 = vmatprep.subr.bf16.mxu0 %v1451
        %1509 = vmatpush2.bf16.msra.mxu0 %v1450
        %1510 = vmatprep.subr.bf16.mxu0 %v1449
        %1511 = vmatpush2.bf16.msra.mxu0 %v1448
        %1512 = vmatprep.subr.bf16.mxu0 %v1447
        %1513 = vmatpush2.bf16.msra.mxu0 %v1446
        %1514 = vmatprep.subr.bf16.mxu0 %v1445
        %1515 = vmatpush2.bf16.msra.mxu0 %v1444
        %1516 = vmatprep.subr.bf16.mxu0 %v1443
        %1517 = vmatpush2.bf16.msra.mxu0 %v1442
        %1518 = vmatprep.subr.bf16.mxu0 %v1441
        %1519 = vmatpush2.bf16.msra.mxu0 %v1440
        %1520 = vmatprep.mubr.bf16.mxu0 %v1221
        %1521 = vmatmul.mubr.bf16.gmra.mxu0 %v1220
        %v1522 = vpop.f32.mrf.mxu0
        %v1523 = vadd.f32 %v1321, %v1522
        %v1524 = vpop.f32.mrf.mxu0
        %v1525 = vadd.f32 %v1325, %v1524
        %v1526 = vpop.f32.mrf.mxu0
        %v1527 = vadd.f32 %v1321, %v1526
        %v1528 = vpop.f32.mrf.mxu0
        %v1529 = vadd.f32 %v1325, %v1528
        %1530 = vmatprep.mubr.bf16.mxu0 %v1223
        %1531 = vmatmul.mubr.bf16.gmra.mxu0 %v1222
        %v1532 = vpop.f32.mrf.mxu0
        %v1533 = vadd.f32 %v1321, %v1532
        %v1534 = vpop.f32.mrf.mxu0
        %v1535 = vadd.f32 %v1325, %v1534
        %v1536 = vpop.f32.mrf.mxu0
        %v1537 = vadd.f32 %v1321, %v1536
        %v1538 = vpop.f32.mrf.mxu0
        %v1539 = vadd.f32 %v1325, %v1538
        %1540 = vmatprep.mubr.bf16.mxu0 %v1225
        %1541 = vmatmul.mubr.bf16.gmra.mxu0 %v1224
        %v1542 = vpop.f32.mrf.mxu0
        %v1543 = vadd.f32 %v1321, %v1542
        %v1544 = vpop.f32.mrf.mxu0
        %v1545 = vadd.f32 %v1325, %v1544
        %v1546 = vpop.f32.mrf.mxu0
        %v1547 = vadd.f32 %v1321, %v1546
        %v1548 = vpop.f32.mrf.mxu0
        %v1549 = vadd.f32 %v1325, %v1548
        %1550 = vmatprep.mubr.bf16.mxu0 %v1227
        %1551 = vmatmul.mubr.bf16.gmra.mxu0 %v1226
        %v1552 = vpop.f32.mrf.mxu0
        %v1553 = vadd.f32 %v1321, %v1552
        %v1554 = vpop.f32.mrf.mxu0
        %v1555 = vadd.f32 %v1325, %v1554
        %v1556 = vpop.f32.mrf.mxu0
        %v1557 = vadd.f32 %v1321, %v1556
        %v1558 = vpop.f32.mrf.mxu0
        %v1559 = vadd.f32 %v1325, %v1558
        %1560 = vmatprep.mubr.bf16.mxu0 %v1229
        %1561 = vmatmul.mubr.bf16.gmra.mxu0 %v1228
        %v1562 = vpop.f32.mrf.mxu0
        %v1563 = vadd.f32 %v1321, %v1562
        %v1564 = vpop.f32.mrf.mxu0
        %v1565 = vadd.f32 %v1325, %v1564
        %v1566 = vpop.f32.mrf.mxu0
        %v1567 = vadd.f32 %v1321, %v1566
        %v1568 = vpop.f32.mrf.mxu0
        %v1569 = vadd.f32 %v1325, %v1568
        %1570 = vmatprep.mubr.bf16.mxu0 %v1231
        %1571 = vmatmul.mubr.bf16.gmra.mxu0 %v1230
        %v1572 = vpop.f32.mrf.mxu0
        %v1573 = vadd.f32 %v1321, %v1572
        %v1574 = vpop.f32.mrf.mxu0
        %v1575 = vadd.f32 %v1325, %v1574
        %v1576 = vpop.f32.mrf.mxu0
        %v1577 = vadd.f32 %v1321, %v1576
        %v1578 = vpop.f32.mrf.mxu0
        %v1579 = vadd.f32 %v1325, %v1578
        %1580 = vmatprep.mubr.bf16.mxu0 %v1233
        %1581 = vmatmul.mubr.bf16.gmra.mxu0 %v1232
        %v1582 = vpop.f32.mrf.mxu0
        %v1583 = vadd.f32 %v1321, %v1582
        %v1584 = vpop.f32.mrf.mxu0
        %v1585 = vadd.f32 %v1325, %v1584
        %v1586 = vpop.f32.mrf.mxu0
        %v1587 = vadd.f32 %v1321, %v1586
        %v1588 = vpop.f32.mrf.mxu0
        %v1589 = vadd.f32 %v1325, %v1588
        %1590 = vmatprep.mubr.bf16.mxu0 %v1235
        %1591 = vmatmul.mubr.bf16.gmra.mxu0 %v1234
        %v1592 = vpop.f32.mrf.mxu0
        %v1593 = vadd.f32 %v1321, %v1592
        %v1594 = vpop.f32.mrf.mxu0
        %v1595 = vadd.f32 %v1325, %v1594
        %v1596 = vpop.f32.mrf.mxu0
        %v1597 = vadd.f32 %v1321, %v1596
        %v1598 = vpop.f32.mrf.mxu0
        %v1599 = vadd.f32 %v1325, %v1598
        %1600 = vmatprep.mubr.bf16.mxu0 %v1237
        %1601 = vmatmul.mubr.bf16.gmra.mxu0 %v1236
        %v1602 = vpop.f32.mrf.mxu0
        %v1603 = vadd.f32 %v1321, %v1602
        %v1604 = vpop.f32.mrf.mxu0
        %v1605 = vadd.f32 %v1325, %v1604
        %v1606 = vpop.f32.mrf.mxu0
        %v1607 = vadd.f32 %v1321, %v1606
        %v1608 = vpop.f32.mrf.mxu0
        %v1609 = vadd.f32 %v1325, %v1608
        %1610 = vmatprep.mubr.bf16.mxu0 %v1239
        %1611 = vmatmul.mubr.bf16.gmra.mxu0 %v1238
        %v1612 = vpop.f32.mrf.mxu0
        %v1613 = vadd.f32 %v1321, %v1612
        %v1614 = vpop.f32.mrf.mxu0
        %v1615 = vadd.f32 %v1325, %v1614
        %v1616 = vpop.f32.mrf.mxu0
        %v1617 = vadd.f32 %v1321, %v1616
        %v1618 = vpop.f32.mrf.mxu0
        %v1619 = vadd.f32 %v1325, %v1618
        %1620 = vmatprep.mubr.bf16.mxu0 %v1241
        %1621 = vmatmul.mubr.bf16.gmra.mxu0 %v1240
        %v1622 = vpop.f32.mrf.mxu0
        %v1623 = vadd.f32 %v1321, %v1622
        %v1624 = vpop.f32.mrf.mxu0
        %v1625 = vadd.f32 %v1325, %v1624
        %v1626 = vpop.f32.mrf.mxu0
        %v1627 = vadd.f32 %v1321, %v1626
        %v1628 = vpop.f32.mrf.mxu0
        %v1629 = vadd.f32 %v1325, %v1628
        %1630 = vmatprep.mubr.bf16.mxu0 %v1243
        %1631 = vmatmul.mubr.bf16.gmra.mxu0 %v1242
        %v1632 = vpop.f32.mrf.mxu0
        %v1633 = vadd.f32 %v1321, %v1632
        %v1634 = vpop.f32.mrf.mxu0
        %v1635 = vadd.f32 %v1325, %v1634
        %v1636 = vpop.f32.mrf.mxu0
        %v1637 = vadd.f32 %v1321, %v1636
        %v1638 = vpop.f32.mrf.mxu0
        %v1639 = vadd.f32 %v1325, %v1638
        %1640 = vmatprep.mubr.bf16.mxu0 %v1245
        %1641 = vmatmul.mubr.bf16.gmra.mxu0 %v1244
        %v1642 = vpop.f32.mrf.mxu0
        %v1643 = vadd.f32 %v1321, %v1642
        %v1644 = vpop.f32.mrf.mxu0
        %v1645 = vadd.f32 %v1325, %v1644
        %v1646 = vpop.f32.mrf.mxu0
        %v1647 = vadd.f32 %v1321, %v1646
        %v1648 = vpop.f32.mrf.mxu0
        %v1649 = vadd.f32 %v1325, %v1648
        %1650 = vmatprep.mubr.bf16.mxu0 %v1247
        %1651 = vmatmul.mubr.bf16.gmra.mxu0 %v1246
        %v1652 = vpop.f32.mrf.mxu0
        %v1653 = vadd.f32 %v1321, %v1652
        %v1654 = vpop.f32.mrf.mxu0
        %v1655 = vadd.f32 %v1325, %v1654
        %v1656 = vpop.f32.mrf.mxu0
        %v1657 = vadd.f32 %v1321, %v1656
        %v1658 = vpop.f32.mrf.mxu0
        %v1659 = vadd.f32 %v1325, %v1658
        %1660 = vmatprep.mubr.bf16.mxu0 %v1249
        %1661 = vmatmul.mubr.bf16.gmra.mxu0 %v1248
        %v1662 = vpop.f32.mrf.mxu0
        %v1663 = vadd.f32 %v1321, %v1662
        %v1664 = vpop.f32.mrf.mxu0
        %v1665 = vadd.f32 %v1325, %v1664
        %v1666 = vpop.f32.mrf.mxu0
        %v1667 = vadd.f32 %v1321, %v1666
        %v1668 = vpop.f32.mrf.mxu0
        %v1669 = vadd.f32 %v1325, %v1668
        %1670 = vmatprep.mubr.bf16.mxu0 %v1251
        %1671 = vmatmul.mubr.bf16.gmra.mxu0 %v1250
        %v1672 = vpop.f32.mrf.mxu0
        %v1673 = vadd.f32 %v1321, %v1672
        %v1674 = vpop.f32.mrf.mxu0
        %v1675 = vadd.f32 %v1325, %v1674
        %v1676 = vpop.f32.mrf.mxu0
        %v1677 = vadd.f32 %v1321, %v1676
        %v1678 = vpop.f32.mrf.mxu0
        %v1679 = vadd.f32 %v1325, %v1678
        %1680 = vmatprep.mubr.bf16.mxu0 %v1253
        %1681 = vmatmul.mubr.bf16.gmra.mxu0 %v1252
        %v1682 = vpop.f32.mrf.mxu0
        %v1683 = vadd.f32 %v1321, %v1682
        %v1684 = vpop.f32.mrf.mxu0
        %v1685 = vadd.f32 %v1325, %v1684
        %v1686 = vpop.f32.mrf.mxu0
        %v1687 = vadd.f32 %v1321, %v1686
        %v1688 = vpop.f32.mrf.mxu0
        %v1689 = vadd.f32 %v1325, %v1688
        %1690 = vmatprep.mubr.bf16.mxu0 %v1255
        %1691 = vmatmul.mubr.bf16.gmra.mxu0 %v1254
        %v1692 = vpop.f32.mrf.mxu0
        %v1693 = vadd.f32 %v1321, %v1692
        %v1694 = vpop.f32.mrf.mxu0
        %v1695 = vadd.f32 %v1325, %v1694
        %v1696 = vpop.f32.mrf.mxu0
        %v1697 = vadd.f32 %v1321, %v1696
        %v1698 = vpop.f32.mrf.mxu0
        %v1699 = vadd.f32 %v1325, %v1698
        %1700 = vmatprep.mubr.bf16.mxu0 %v1257
        %1701 = vmatmul.mubr.bf16.gmra.mxu0 %v1256
        %v1702 = vpop.f32.mrf.mxu0
        %v1703 = vadd.f32 %v1321, %v1702
        %v1704 = vpop.f32.mrf.mxu0
        %v1705 = vadd.f32 %v1325, %v1704
        %v1706 = vpop.f32.mrf.mxu0
        %v1707 = vadd.f32 %v1321, %v1706
        %v1708 = vpop.f32.mrf.mxu0
        %v1709 = vadd.f32 %v1325, %v1708
        %1710 = vmatprep.mubr.bf16.mxu0 %v1259
        %1711 = vmatmul.mubr.bf16.gmra.mxu0 %v1258
        %v1712 = vpop.f32.mrf.mxu0
        %v1713 = vadd.f32 %v1321, %v1712
        %v1714 = vpop.f32.mrf.mxu0
        %v1715 = vadd.f32 %v1325, %v1714
        %v1716 = vpop.f32.mrf.mxu0
        %v1717 = vadd.f32 %v1321, %v1716
        %v1718 = vpop.f32.mrf.mxu0
        %v1719 = vadd.f32 %v1325, %v1718
        %1720 = vmatprep.mubr.bf16.mxu0 %v1261
        %1721 = vmatmul.mubr.bf16.gmra.mxu0 %v1260
        %v1722 = vpop.f32.mrf.mxu0
        %v1723 = vadd.f32 %v1321, %v1722
        %v1724 = vpop.f32.mrf.mxu0
        %v1725 = vadd.f32 %v1325, %v1724
        %v1726 = vpop.f32.mrf.mxu0
        %v1727 = vadd.f32 %v1321, %v1726
        %v1728 = vpop.f32.mrf.mxu0
        %v1729 = vadd.f32 %v1325, %v1728
        %1730 = vmatprep.mubr.bf16.mxu0 %v1263
        %1731 = vmatmul.mubr.bf16.gmra.mxu0 %v1262
        %v1732 = vpop.f32.mrf.mxu0
        %v1733 = vadd.f32 %v1321, %v1732
        %v1734 = vpop.f32.mrf.mxu0
        %v1735 = vadd.f32 %v1325, %v1734
        %v1736 = vpop.f32.mrf.mxu0
        %v1737 = vadd.f32 %v1321, %v1736
        %v1738 = vpop.f32.mrf.mxu0
        %v1739 = vadd.f32 %v1325, %v1738
        %1740 = vmatprep.mubr.bf16.mxu0 %v1265
        %1741 = vmatmul.mubr.bf16.gmra.mxu0 %v1264
        %v1742 = vpop.f32.mrf.mxu0
        %v1743 = vadd.f32 %v1321, %v1742
        %v1744 = vpop.f32.mrf.mxu0
        %v1745 = vadd.f32 %v1325, %v1744
        %v1746 = vpop.f32.mrf.mxu0
        %v1747 = vadd.f32 %v1321, %v1746
        %v1748 = vpop.f32.mrf.mxu0
        %v1749 = vadd.f32 %v1325, %v1748
        %1750 = vmatprep.mubr.bf16.mxu0 %v1267
        %1751 = vmatmul.mubr.bf16.gmra.mxu0 %v1266
        %v1752 = vpop.f32.mrf.mxu0
        %v1753 = vadd.f32 %v1321, %v1752
        %v1754 = vpop.f32.mrf.mxu0
        %v1755 = vadd.f32 %v1325, %v1754
        %v1756 = vpop.f32.mrf.mxu0
        %v1757 = vadd.f32 %v1321, %v1756
        %v1758 = vpop.f32.mrf.mxu0
        %v1759 = vadd.f32 %v1325, %v1758
        %1760 = vmatprep.mubr.bf16.mxu0 %v1269
        %1761 = vmatmul.mubr.bf16.gmra.mxu0 %v1268
        %v1762 = vpop.f32.mrf.mxu0
        %v1763 = vadd.f32 %v1321, %v1762
        %v1764 = vpop.f32.mrf.mxu0
        %v1765 = vadd.f32 %v1325, %v1764
        %v1766 = vpop.f32.mrf.mxu0
        %v1767 = vadd.f32 %v1321, %v1766
        %v1768 = vpop.f32.mrf.mxu0
        %v1769 = vadd.f32 %v1325, %v1768
        %1770 = vmatprep.mubr.bf16.mxu0 %v1271
        %1771 = vmatmul.mubr.bf16.gmra.mxu0 %v1270
        %v1772 = vpop.f32.mrf.mxu0
        %v1773 = vadd.f32 %v1321, %v1772
        %v1774 = vpop.f32.mrf.mxu0
        %v1775 = vadd.f32 %v1325, %v1774
        %v1776 = vpop.f32.mrf.mxu0
        %v1777 = vadd.f32 %v1321, %v1776
        %v1778 = vpop.f32.mrf.mxu0
        %v1779 = vadd.f32 %v1325, %v1778
        %1780 = vmatprep.mubr.bf16.mxu0 %v1273
        %1781 = vmatmul.mubr.bf16.gmra.mxu0 %v1272
        %v1782 = vpop.f32.mrf.mxu0
        %v1783 = vadd.f32 %v1321, %v1782
        %v1784 = vpop.f32.mrf.mxu0
        %v1785 = vadd.f32 %v1325, %v1784
        %v1786 = vpop.f32.mrf.mxu0
        %v1787 = vadd.f32 %v1321, %v1786
        %v1788 = vpop.f32.mrf.mxu0
        %v1789 = vadd.f32 %v1325, %v1788
        %1790 = vmatprep.mubr.bf16.mxu0 %v1275
        %1791 = vmatmul.mubr.bf16.gmra.mxu0 %v1274
        %v1792 = vpop.f32.mrf.mxu0
        %v1793 = vadd.f32 %v1321, %v1792
        %v1794 = vpop.f32.mrf.mxu0
        %v1795 = vadd.f32 %v1325, %v1794
        %v1796 = vpop.f32.mrf.mxu0
        %v1797 = vadd.f32 %v1321, %v1796
        %v1798 = vpop.f32.mrf.mxu0
        %v1799 = vadd.f32 %v1325, %v1798
        %1800 = vmatprep.mubr.bf16.mxu0 %v1277
        %1801 = vmatmul.mubr.bf16.gmra.mxu0 %v1276
        %v1802 = vpop.f32.mrf.mxu0
        %v1803 = vadd.f32 %v1321, %v1802
        %v1804 = vpop.f32.mrf.mxu0
        %v1805 = vadd.f32 %v1325, %v1804
        %v1806 = vpop.f32.mrf.mxu0
        %v1807 = vadd.f32 %v1321, %v1806
        %v1808 = vpop.f32.mrf.mxu0
        %v1809 = vadd.f32 %v1325, %v1808
        %1810 = vmatprep.mubr.bf16.mxu0 %v1279
        %1811 = vmatmul.mubr.bf16.gmra.mxu0 %v1278
        %v1812 = vpop.f32.mrf.mxu0
        %v1813 = vadd.f32 %v1321, %v1812
        %v1814 = vpop.f32.mrf.mxu0
        %v1815 = vadd.f32 %v1325, %v1814
        %v1816 = vpop.f32.mrf.mxu0
        %v1817 = vadd.f32 %v1321, %v1816
        %v1818 = vpop.f32.mrf.mxu0
        %v1819 = vadd.f32 %v1325, %v1818
        %1820 = vmatprep.mubr.bf16.mxu0 %v1281
        %1821 = vmatmul.mubr.bf16.gmra.mxu0 %v1280
        %v1822 = vpop.f32.mrf.mxu0
        %v1823 = vadd.f32 %v1321, %v1822
        %v1824 = vpop.f32.mrf.mxu0
        %v1825 = vadd.f32 %v1325, %v1824
        %v1826 = vpop.f32.mrf.mxu0
        %v1827 = vadd.f32 %v1321, %v1826
        %v1828 = vpop.f32.mrf.mxu0
        %v1829 = vadd.f32 %v1325, %v1828
        %1830 = vmatprep.mubr.bf16.mxu0 %v1283
        %1831 = vmatmul.mubr.bf16.gmra.mxu0 %v1282
        %v1832 = vpop.f32.mrf.mxu0
        %v1833 = vadd.f32 %v1321, %v1832
        %v1834 = vpop.f32.mrf.mxu0
        %v1835 = vadd.f32 %v1325, %v1834
        %v1836 = vpop.f32.mrf.mxu0
        %v1837 = vadd.f32 %v1321, %v1836
        %v1838 = vpop.f32.mrf.mxu0
        %v1839 = vadd.f32 %v1325, %v1838
        %1840 = vdwg.mxu0
        %v1841 = vmax.f32 %v1523, 0.0
        %v1842 = vmax.f32 %v1525, 0.0
        %v1843 = vmax.f32 %v1527, 0.0
        %v1844 = vmax.f32 %v1529, 0.0
        %v1845 = vmax.f32 %v1533, 0.0
        %v1846 = vmax.f32 %v1535, 0.0
        %v1847 = vmax.f32 %v1537, 0.0
        %v1848 = vmax.f32 %v1539, 0.0
        %v1849 = vmax.f32 %v1543, 0.0
        %v1850 = vmax.f32 %v1545, 0.0
        %v1851 = vmax.f32 %v1547, 0.0
        %v1852 = vmax.f32 %v1549, 0.0
        %v1853 = vmax.f32 %v1553, 0.0
        %v1854 = vmax.f32 %v1555, 0.0
        %v1855 = vmax.f32 %v1557, 0.0
        %v1856 = vmax.f32 %v1559, 0.0
        %v1857 = vmax.f32 %v1563, 0.0
        %v1858 = vmax.f32 %v1565, 0.0
        %v1859 = vmax.f32 %v1567, 0.0
        %v1860 = vmax.f32 %v1569, 0.0
        %v1861 = vmax.f32 %v1573, 0.0
        %v1862 = vmax.f32 %v1575, 0.0
        %v1863 = vmax.f32 %v1577, 0.0
        %v1864 = vmax.f32 %v1579, 0.0
        %v1865 = vmax.f32 %v1583, 0.0
        %v1866 = vmax.f32 %v1585, 0.0
        %v1867 = vmax.f32 %v1587, 0.0
        %v1868 = vmax.f32 %v1589, 0.0
        %v1869 = vmax.f32 %v1593, 0.0
        %v1870 = vmax.f32 %v1595, 0.0
        %v1871 = vmax.f32 %v1597, 0.0
        %v1872 = vmax.f32 %v1599, 0.0
        %v1873 = vmax.f32 %v1603, 0.0
        %v1874 = vmax.f32 %v1605, 0.0
        %v1875 = vmax.f32 %v1607, 0.0
        %v1876 = vmax.f32 %v1609, 0.0
        %v1877 = vmax.f32 %v1613, 0.0
        %v1878 = vmax.f32 %v1615, 0.0
        %v1879 = vmax.f32 %v1617, 0.0
        %v1880 = vmax.f32 %v1619, 0.0
        %v1881 = vmax.f32 %v1623, 0.0
        %v1882 = vmax.f32 %v1625, 0.0
        %v1883 = vmax.f32 %v1627, 0.0
        %v1884 = vmax.f32 %v1629, 0.0
        %v1885 = vmax.f32 %v1633, 0.0
        %v1886 = vmax.f32 %v1635, 0.0
        %v1887 = vmax.f32 %v1637, 0.0
        %v1888 = vmax.f32 %v1639, 0.0
        %v1889 = vmax.f32 %v1643, 0.0
        %v1890 = vmax.f32 %v1645, 0.0
        %v1891 = vmax.f32 %v1647, 0.0
        %v1892 = vmax.f32 %v1649, 0.0
        %v1893 = vmax.f32 %v1653, 0.0
        %v1894 = vmax.f32 %v1655, 0.0
        %v1895 = vmax.f32 %v1657, 0.0
        %v1896 = vmax.f32 %v1659, 0.0
        %v1897 = vmax.f32 %v1663, 0.0
        %v1898 = vmax.f32 %v1665, 0.0
        %v1899 = vmax.f32 %v1667, 0.0
        %v1900 = vmax.f32 %v1669, 0.0
        %v1901 = vmax.f32 %v1673, 0.0
        %v1902 = vmax.f32 %v1675, 0.0
        %v1903 = vmax.f32 %v1677, 0.0
        %v1904 = vmax.f32 %v1679, 0.0
        %v1905 = vmax.f32 %v1683, 0.0
        %v1906 = vmax.f32 %v1685, 0.0
        %v1907 = vmax.f32 %v1687, 0.0
        %v1908 = vmax.f32 %v1689, 0.0
        %v1909 = vmax.f32 %v1693, 0.0
        %v1910 = vmax.f32 %v1695, 0.0
        %v1911 = vmax.f32 %v1697, 0.0
        %v1912 = vmax.f32 %v1699, 0.0
        %v1913 = vmax.f32 %v1703, 0.0
        %v1914 = vmax.f32 %v1705, 0.0
        %v1915 = vmax.f32 %v1707, 0.0
        %v1916 = vmax.f32 %v1709, 0.0
        %v1917 = vmax.f32 %v1713, 0.0
        %v1918 = vmax.f32 %v1715, 0.0
        %v1919 = vmax.f32 %v1717, 0.0
        %v1920 = vmax.f32 %v1719, 0.0
        %v1921 = vmax.f32 %v1723, 0.0
        %v1922 = vmax.f32 %v1725, 0.0
        %v1923 = vmax.f32 %v1727, 0.0
        %v1924 = vmax.f32 %v1729, 0.0
        %v1925 = vmax.f32 %v1733, 0.0
        %v1926 = vmax.f32 %v1735, 0.0
        %v1927 = vmax.f32 %v1737, 0.0
        %v1928 = vmax.f32 %v1739, 0.0
        %v1929 = vmax.f32 %v1743, 0.0
        %v1930 = vmax.f32 %v1745, 0.0
        %v1931 = vmax.f32 %v1747, 0.0
        %v1932 = vmax.f32 %v1749, 0.0
        %v1933 = vmax.f32 %v1753, 0.0
        %v1934 = vmax.f32 %v1755, 0.0
        %v1935 = vmax.f32 %v1757, 0.0
        %v1936 = vmax.f32 %v1759, 0.0
        %v1937 = vmax.f32 %v1763, 0.0
        %v1938 = vmax.f32 %v1765, 0.0
        %v1939 = vmax.f32 %v1767, 0.0
        %v1940 = vmax.f32 %v1769, 0.0
        %v1941 = vmax.f32 %v1773, 0.0
        %v1942 = vmax.f32 %v1775, 0.0
        %v1943 = vmax.f32 %v1777, 0.0
        %v1944 = vmax.f32 %v1779, 0.0
        %v1945 = vmax.f32 %v1783, 0.0
        %v1946 = vmax.f32 %v1785, 0.0
        %v1947 = vmax.f32 %v1787, 0.0
        %v1948 = vmax.f32 %v1789, 0.0
        %v1949 = vmax.f32 %v1793, 0.0
        %v1950 = vmax.f32 %v1795, 0.0
        %v1951 = vmax.f32 %v1797, 0.0
        %v1952 = vmax.f32 %v1799, 0.0
        %v1953 = vmax.f32 %v1803, 0.0
        %v1954 = vmax.f32 %v1805, 0.0
        %v1955 = vmax.f32 %v1807, 0.0
        %v1956 = vmax.f32 %v1809, 0.0
        %v1957 = vmax.f32 %v1813, 0.0
        %v1958 = vmax.f32 %v1815, 0.0
        %v1959 = vmax.f32 %v1817, 0.0
        %v1960 = vmax.f32 %v1819, 0.0
        %v1961 = vmax.f32 %v1823, 0.0
        %v1962 = vmax.f32 %v1825, 0.0
        %v1963 = vmax.f32 %v1827, 0.0
        %v1964 = vmax.f32 %v1829, 0.0
        %v1965 = vmax.f32 %v1833, 0.0
        %v1966 = vmax.f32 %v1835, 0.0
        %v1967 = vmax.f32 %v1837, 0.0
        %v1968 = vmax.f32 %v1839, 0.0
        %v1969 = vld [vmem:[%s5] sm:$0x3]
        %v1971 = vlaneseq
        %v1972 = vshrl.u32 %v1971, 7
        %v1973 = vsub.s32 0, %v1972
        %v1974 = vrot.slane %v1969, %v1973
        %v1975 = vlaneseq
        %v1976 = vshrl.u32 %v1975, 7
        %v1977 = vsub.s32 1, %v1976
        %v1978 = vrot.slane %v1969, %v1977
        %v1981 = vmul.f32 %v1841, %v1974
        %v1982 = vmul.f32 %v1842, %v1978
        %v1983 = vmul.f32 %v1843, %v1974
        %v1984 = vmul.f32 %v1844, %v1978
        %v1985 = vmul.f32 %v1845, %v1974
        %v1986 = vmul.f32 %v1846, %v1978
        %v1987 = vmul.f32 %v1847, %v1974
        %v1988 = vmul.f32 %v1848, %v1978
        %v1989 = vmul.f32 %v1849, %v1974
        %v1990 = vmul.f32 %v1850, %v1978
        %v1991 = vmul.f32 %v1851, %v1974
        %v1992 = vmul.f32 %v1852, %v1978
        %v1993 = vmul.f32 %v1853, %v1974
        %v1994 = vmul.f32 %v1854, %v1978
        %v1995 = vmul.f32 %v1855, %v1974
        %v1996 = vmul.f32 %v1856, %v1978
        %v1997 = vmul.f32 %v1857, %v1974
        %v1998 = vmul.f32 %v1858, %v1978
        %v1999 = vmul.f32 %v1859, %v1974
        %v2000 = vmul.f32 %v1860, %v1978
        %v2001 = vmul.f32 %v1861, %v1974
        %v2002 = vmul.f32 %v1862, %v1978
        %v2003 = vmul.f32 %v1863, %v1974
        %v2004 = vmul.f32 %v1864, %v1978
        %v2005 = vmul.f32 %v1865, %v1974
        %v2006 = vmul.f32 %v1866, %v1978
        %v2007 = vmul.f32 %v1867, %v1974
        %v2008 = vmul.f32 %v1868, %v1978
        %v2009 = vmul.f32 %v1869, %v1974
        %v2010 = vmul.f32 %v1870, %v1978
        %v2011 = vmul.f32 %v1871, %v1974
        %v2012 = vmul.f32 %v1872, %v1978
        %v2013 = vmul.f32 %v1873, %v1974
        %v2014 = vmul.f32 %v1874, %v1978
        %v2015 = vmul.f32 %v1875, %v1974
        %v2016 = vmul.f32 %v1876, %v1978
        %v2017 = vmul.f32 %v1877, %v1974
        %v2018 = vmul.f32 %v1878, %v1978
        %v2019 = vmul.f32 %v1879, %v1974
        %v2020 = vmul.f32 %v1880, %v1978
        %v2021 = vmul.f32 %v1881, %v1974
        %v2022 = vmul.f32 %v1882, %v1978
        %v2023 = vmul.f32 %v1883, %v1974
        %v2024 = vmul.f32 %v1884, %v1978
        %v2025 = vmul.f32 %v1885, %v1974
        %v2026 = vmul.f32 %v1886, %v1978
        %v2027 = vmul.f32 %v1887, %v1974
        %v2028 = vmul.f32 %v1888, %v1978
        %v2029 = vmul.f32 %v1889, %v1974
        %v2030 = vmul.f32 %v1890, %v1978
        %v2031 = vmul.f32 %v1891, %v1974
        %v2032 = vmul.f32 %v1892, %v1978
        %v2033 = vmul.f32 %v1893, %v1974
        %v2034 = vmul.f32 %v1894, %v1978
        %v2035 = vmul.f32 %v1895, %v1974
        %v2036 = vmul.f32 %v1896, %v1978
        %v2037 = vmul.f32 %v1897, %v1974
        %v2038 = vmul.f32 %v1898, %v1978
        %v2039 = vmul.f32 %v1899, %v1974
        %v2040 = vmul.f32 %v1900, %v1978
        %v2041 = vmul.f32 %v1901, %v1974
        %v2042 = vmul.f32 %v1902, %v1978
        %v2043 = vmul.f32 %v1903, %v1974
        %v2044 = vmul.f32 %v1904, %v1978
        %v2045 = vmul.f32 %v1905, %v1974
        %v2046 = vmul.f32 %v1906, %v1978
        %v2047 = vmul.f32 %v1907, %v1974
        %v2048 = vmul.f32 %v1908, %v1978
        %v2049 = vmul.f32 %v1909, %v1974
        %v2050 = vmul.f32 %v1910, %v1978
        %v2051 = vmul.f32 %v1911, %v1974
        %v2052 = vmul.f32 %v1912, %v1978
        %v2053 = vmul.f32 %v1913, %v1974
        %v2054 = vmul.f32 %v1914, %v1978
        %v2055 = vmul.f32 %v1915, %v1974
        %v2056 = vmul.f32 %v1916, %v1978
        %v2057 = vmul.f32 %v1917, %v1974
        %v2058 = vmul.f32 %v1918, %v1978
        %v2059 = vmul.f32 %v1919, %v1974
        %v2060 = vmul.f32 %v1920, %v1978
        %v2061 = vmul.f32 %v1921, %v1974
        %v2062 = vmul.f32 %v1922, %v1978
        %v2063 = vmul.f32 %v1923, %v1974
        %v2064 = vmul.f32 %v1924, %v1978
        %v2065 = vmul.f32 %v1925, %v1974
        %v2066 = vmul.f32 %v1926, %v1978
        %v2067 = vmul.f32 %v1927, %v1974
        %v2068 = vmul.f32 %v1928, %v1978
        %v2069 = vmul.f32 %v1929, %v1974
        %v2070 = vmul.f32 %v1930, %v1978
        %v2071 = vmul.f32 %v1931, %v1974
        %v2072 = vmul.f32 %v1932, %v1978
        %v2073 = vmul.f32 %v1933, %v1974
        %v2074 = vmul.f32 %v1934, %v1978
        %v2075 = vmul.f32 %v1935, %v1974
        %v2076 = vmul.f32 %v1936, %v1978
        %v2077 = vmul.f32 %v1937, %v1974
        %v2078 = vmul.f32 %v1938, %v1978
        %v2079 = vmul.f32 %v1939, %v1974
        %v2080 = vmul.f32 %v1940, %v1978
        %v2081 = vmul.f32 %v1941, %v1974
        %v2082 = vmul.f32 %v1942, %v1978
        %v2083 = vmul.f32 %v1943, %v1974
        %v2084 = vmul.f32 %v1944, %v1978
        %v2085 = vmul.f32 %v1945, %v1974
        %v2086 = vmul.f32 %v1946, %v1978
        %v2087 = vmul.f32 %v1947, %v1974
        %v2088 = vmul.f32 %v1948, %v1978
        %v2089 = vmul.f32 %v1949, %v1974
        %v2090 = vmul.f32 %v1950, %v1978
        %v2091 = vmul.f32 %v1951, %v1974
        %v2092 = vmul.f32 %v1952, %v1978
        %v2093 = vmul.f32 %v1953, %v1974
        %v2094 = vmul.f32 %v1954, %v1978
        %v2095 = vmul.f32 %v1955, %v1974
        %v2096 = vmul.f32 %v1956, %v1978
        %v2097 = vmul.f32 %v1957, %v1974
        %v2098 = vmul.f32 %v1958, %v1978
        %v2099 = vmul.f32 %v1959, %v1974
        %v2100 = vmul.f32 %v1960, %v1978
        %v2101 = vmul.f32 %v1961, %v1974
        %v2102 = vmul.f32 %v1962, %v1978
        %v2103 = vmul.f32 %v1963, %v1974
        %v2104 = vmul.f32 %v1964, %v1978
        %v2105 = vmul.f32 %v1965, %v1974
        %v2106 = vmul.f32 %v1966, %v1978
        %v2107 = vmul.f32 %v1967, %v1974
        %v2108 = vmul.f32 %v1968, %v1978
        %v2109 = vadd.f32 %v1981, %v1982
        %2110 = vadd.xlane.f32.xlu0 %v2109
        %v2111 = vpop.xlane.xlu0 %2110
        %v2112 = vadd.f32 %v1983, %v1984
        %2113 = vadd.xlane.f32.xlu0 %v2112
        %v2114 = vpop.xlane.xlu0 %2113
        %v2115 = vadd.f32 %v1985, %v1986
        %2116 = vadd.xlane.f32.xlu0 %v2115
        %v2117 = vpop.xlane.xlu0 %2116
        %v2118 = vadd.f32 %v1987, %v1988
        %2119 = vadd.xlane.f32.xlu0 %v2118
        %v2120 = vpop.xlane.xlu0 %2119
        %v2121 = vadd.f32 %v1989, %v1990
        %2122 = vadd.xlane.f32.xlu0 %v2121
        %v2123 = vpop.xlane.xlu0 %2122
        %v2124 = vadd.f32 %v1991, %v1992
        %2125 = vadd.xlane.f32.xlu0 %v2124
        %v2126 = vpop.xlane.xlu0 %2125
        %v2127 = vadd.f32 %v1993, %v1994
        %2128 = vadd.xlane.f32.xlu0 %v2127
        %v2129 = vpop.xlane.xlu0 %2128
        %v2130 = vadd.f32 %v1995, %v1996
        %2131 = vadd.xlane.f32.xlu0 %v2130
        %v2132 = vpop.xlane.xlu0 %2131
        %v2133 = vadd.f32 %v1997, %v1998
        %2134 = vadd.xlane.f32.xlu0 %v2133
        %v2135 = vpop.xlane.xlu0 %2134
        %v2136 = vadd.f32 %v1999, %v2000
        %2137 = vadd.xlane.f32.xlu0 %v2136
        %v2138 = vpop.xlane.xlu0 %2137
        %v2139 = vadd.f32 %v2001, %v2002
        %2140 = vadd.xlane.f32.xlu0 %v2139
        %v2141 = vpop.xlane.xlu0 %2140
        %v2142 = vadd.f32 %v2003, %v2004
        %2143 = vadd.xlane.f32.xlu0 %v2142
        %v2144 = vpop.xlane.xlu0 %2143
        %v2145 = vadd.f32 %v2005, %v2006
        %2146 = vadd.xlane.f32.xlu0 %v2145
        %v2147 = vpop.xlane.xlu0 %2146
        %v2148 = vadd.f32 %v2007, %v2008
        %2149 = vadd.xlane.f32.xlu0 %v2148
        %v2150 = vpop.xlane.xlu0 %2149
        %v2151 = vadd.f32 %v2009, %v2010
        %2152 = vadd.xlane.f32.xlu0 %v2151
        %v2153 = vpop.xlane.xlu0 %2152
        %v2154 = vadd.f32 %v2011, %v2012
        %2155 = vadd.xlane.f32.xlu0 %v2154
        %v2156 = vpop.xlane.xlu0 %2155
        %v2157 = vadd.f32 %v2013, %v2014
        %2158 = vadd.xlane.f32.xlu0 %v2157
        %v2159 = vpop.xlane.xlu0 %2158
        %v2160 = vadd.f32 %v2015, %v2016
        %2161 = vadd.xlane.f32.xlu0 %v2160
        %v2162 = vpop.xlane.xlu0 %2161
        %v2163 = vadd.f32 %v2017, %v2018
        %2164 = vadd.xlane.f32.xlu0 %v2163
        %v2165 = vpop.xlane.xlu0 %2164
        %v2166 = vadd.f32 %v2019, %v2020
        %2167 = vadd.xlane.f32.xlu0 %v2166
        %v2168 = vpop.xlane.xlu0 %2167
        %v2169 = vadd.f32 %v2021, %v2022
        %2170 = vadd.xlane.f32.xlu0 %v2169
        %v2171 = vpop.xlane.xlu0 %2170
        %v2172 = vadd.f32 %v2023, %v2024
        %2173 = vadd.xlane.f32.xlu0 %v2172
        %v2174 = vpop.xlane.xlu0 %2173
        %v2175 = vadd.f32 %v2025, %v2026
        %2176 = vadd.xlane.f32.xlu0 %v2175
        %v2177 = vpop.xlane.xlu0 %2176
        %v2178 = vadd.f32 %v2027, %v2028
        %2179 = vadd.xlane.f32.xlu0 %v2178
        %v2180 = vpop.xlane.xlu0 %2179
        %v2181 = vadd.f32 %v2029, %v2030
        %2182 = vadd.xlane.f32.xlu0 %v2181
        %v2183 = vpop.xlane.xlu0 %2182
        %v2184 = vadd.f32 %v2031, %v2032
        %2185 = vadd.xlane.f32.xlu0 %v2184
        %v2186 = vpop.xlane.xlu0 %2185
        %v2187 = vadd.f32 %v2033, %v2034
        %2188 = vadd.xlane.f32.xlu0 %v2187
        %v2189 = vpop.xlane.xlu0 %2188
        %v2190 = vadd.f32 %v2035, %v2036
        %2191 = vadd.xlane.f32.xlu0 %v2190
        %v2192 = vpop.xlane.xlu0 %2191
        %v2193 = vadd.f32 %v2037, %v2038
        %2194 = vadd.xlane.f32.xlu0 %v2193
        %v2195 = vpop.xlane.xlu0 %2194
        %v2196 = vadd.f32 %v2039, %v2040
        %2197 = vadd.xlane.f32.xlu0 %v2196
        %v2198 = vpop.xlane.xlu0 %2197
        %v2199 = vadd.f32 %v2041, %v2042
        %2200 = vadd.xlane.f32.xlu0 %v2199
        %v2201 = vpop.xlane.xlu0 %2200
        %v2202 = vadd.f32 %v2043, %v2044
        %2203 = vadd.xlane.f32.xlu0 %v2202
        %v2204 = vpop.xlane.xlu0 %2203
        %v2205 = vadd.f32 %v2045, %v2046
        %2206 = vadd.xlane.f32.xlu0 %v2205
        %v2207 = vpop.xlane.xlu0 %2206
        %v2208 = vadd.f32 %v2047, %v2048
        %2209 = vadd.xlane.f32.xlu0 %v2208
        %v2210 = vpop.xlane.xlu0 %2209
        %v2211 = vadd.f32 %v2049, %v2050
        %2212 = vadd.xlane.f32.xlu0 %v2211
        %v2213 = vpop.xlane.xlu0 %2212
        %v2214 = vadd.f32 %v2051, %v2052
        %2215 = vadd.xlane.f32.xlu0 %v2214
        %v2216 = vpop.xlane.xlu0 %2215
        %v2217 = vadd.f32 %v2053, %v2054
        %2218 = vadd.xlane.f32.xlu0 %v2217
        %v2219 = vpop.xlane.xlu0 %2218
        %v2220 = vadd.f32 %v2055, %v2056
        %2221 = vadd.xlane.f32.xlu0 %v2220
        %v2222 = vpop.xlane.xlu0 %2221
        %v2223 = vadd.f32 %v2057, %v2058
        %2224 = vadd.xlane.f32.xlu0 %v2223
        %v2225 = vpop.xlane.xlu0 %2224
        %v2226 = vadd.f32 %v2059, %v2060
        %2227 = vadd.xlane.f32.xlu0 %v2226
        %v2228 = vpop.xlane.xlu0 %2227
        %v2229 = vadd.f32 %v2061, %v2062
        %2230 = vadd.xlane.f32.xlu0 %v2229
        %v2231 = vpop.xlane.xlu0 %2230
        %v2232 = vadd.f32 %v2063, %v2064
        %2233 = vadd.xlane.f32.xlu0 %v2232
        %v2234 = vpop.xlane.xlu0 %2233
        %v2235 = vadd.f32 %v2065, %v2066
        %2236 = vadd.xlane.f32.xlu0 %v2235
        %v2237 = vpop.xlane.xlu0 %2236
        %v2238 = vadd.f32 %v2067, %v2068
        %2239 = vadd.xlane.f32.xlu0 %v2238
        %v2240 = vpop.xlane.xlu0 %2239
        %v2241 = vadd.f32 %v2069, %v2070
        %2242 = vadd.xlane.f32.xlu0 %v2241
        %v2243 = vpop.xlane.xlu0 %2242
        %v2244 = vadd.f32 %v2071, %v2072
        %2245 = vadd.xlane.f32.xlu0 %v2244
        %v2246 = vpop.xlane.xlu0 %2245
        %v2247 = vadd.f32 %v2073, %v2074
        %2248 = vadd.xlane.f32.xlu0 %v2247
        %v2249 = vpop.xlane.xlu0 %2248
        %v2250 = vadd.f32 %v2075, %v2076
        %2251 = vadd.xlane.f32.xlu0 %v2250
        %v2252 = vpop.xlane.xlu0 %2251
        %v2253 = vadd.f32 %v2077, %v2078
        %2254 = vadd.xlane.f32.xlu0 %v2253
        %v2255 = vpop.xlane.xlu0 %2254
        %v2256 = vadd.f32 %v2079, %v2080
        %2257 = vadd.xlane.f32.xlu0 %v2256
        %v2258 = vpop.xlane.xlu0 %2257
        %v2259 = vadd.f32 %v2081, %v2082
        %2260 = vadd.xlane.f32.xlu0 %v2259
        %v2261 = vpop.xlane.xlu0 %2260
        %v2262 = vadd.f32 %v2083, %v2084
        %2263 = vadd.xlane.f32.xlu0 %v2262
        %v2264 = vpop.xlane.xlu0 %2263
        %v2265 = vadd.f32 %v2085, %v2086
        %2266 = vadd.xlane.f32.xlu0 %v2265
        %v2267 = vpop.xlane.xlu0 %2266
        %v2268 = vadd.f32 %v2087, %v2088
        %2269 = vadd.xlane.f32.xlu0 %v2268
        %v2270 = vpop.xlane.xlu0 %2269
        %v2271 = vadd.f32 %v2089, %v2090
        %2272 = vadd.xlane.f32.xlu0 %v2271
        %v2273 = vpop.xlane.xlu0 %2272
        %v2274 = vadd.f32 %v2091, %v2092
        %2275 = vadd.xlane.f32.xlu0 %v2274
        %v2276 = vpop.xlane.xlu0 %2275
        %v2277 = vadd.f32 %v2093, %v2094
        %2278 = vadd.xlane.f32.xlu0 %v2277
        %v2279 = vpop.xlane.xlu0 %2278
        %v2280 = vadd.f32 %v2095, %v2096
        %2281 = vadd.xlane.f32.xlu0 %v2280
        %v2282 = vpop.xlane.xlu0 %2281
        %v2283 = vadd.f32 %v2097, %v2098
        %2284 = vadd.xlane.f32.xlu0 %v2283
        %v2285 = vpop.xlane.xlu0 %2284
        %v2286 = vadd.f32 %v2099, %v2100
        %2287 = vadd.xlane.f32.xlu0 %v2286
        %v2288 = vpop.xlane.xlu0 %2287
        %v2289 = vadd.f32 %v2101, %v2102
        %2290 = vadd.xlane.f32.xlu0 %v2289
        %v2291 = vpop.xlane.xlu0 %2290
        %v2292 = vadd.f32 %v2103, %v2104
        %2293 = vadd.xlane.f32.xlu0 %v2292
        %v2294 = vpop.xlane.xlu0 %2293
        %v2295 = vadd.f32 %v2105, %v2106
        %2296 = vadd.xlane.f32.xlu0 %v2295
        %v2297 = vpop.xlane.xlu0 %2296
        %v2298 = vadd.f32 %v2107, %v2108
        %2299 = vadd.xlane.f32.xlu0 %v2298
        %v2300 = vpop.xlane.xlu0 %2299
        %v2301 = vld [vmem:[#allocation2] sm:$0x1]
        %v2303 = vlaneseq
        %v2304 = vshrl.u32 %v2303, 7
        %v2305 = vsub.s32 0, %v2304
        %v2306 = vrot.slane %v2301, %v2305
        %v2308 = vadd.f32 %v2111, %v2306
        %v2309 = vadd.f32 %v2114, %v2306
        %v2310 = vadd.f32 %v2117, %v2306
        %v2311 = vadd.f32 %v2120, %v2306
        %v2312 = vadd.f32 %v2123, %v2306
        %v2313 = vadd.f32 %v2126, %v2306
        %v2314 = vadd.f32 %v2129, %v2306
        %v2315 = vadd.f32 %v2132, %v2306
        %v2316 = vadd.f32 %v2135, %v2306
        %v2317 = vadd.f32 %v2138, %v2306
        %v2318 = vadd.f32 %v2141, %v2306
        %v2319 = vadd.f32 %v2144, %v2306
        %v2320 = vadd.f32 %v2147, %v2306
        %v2321 = vadd.f32 %v2150, %v2306
        %v2322 = vadd.f32 %v2153, %v2306
        %v2323 = vadd.f32 %v2156, %v2306
        %v2324 = vadd.f32 %v2159, %v2306
        %v2325 = vadd.f32 %v2162, %v2306
        %v2326 = vadd.f32 %v2165, %v2306
        %v2327 = vadd.f32 %v2168, %v2306
        %v2328 = vadd.f32 %v2171, %v2306
        %v2329 = vadd.f32 %v2174, %v2306
        %v2330 = vadd.f32 %v2177, %v2306
        %v2331 = vadd.f32 %v2180, %v2306
        %v2332 = vadd.f32 %v2183, %v2306
        %v2333 = vadd.f32 %v2186, %v2306
        %v2334 = vadd.f32 %v2189, %v2306
        %v2335 = vadd.f32 %v2192, %v2306
        %v2336 = vadd.f32 %v2195, %v2306
        %v2337 = vadd.f32 %v2198, %v2306
        %v2338 = vadd.f32 %v2201, %v2306
        %v2339 = vadd.f32 %v2204, %v2306
        %v2340 = vadd.f32 %v2207, %v2306
        %v2341 = vadd.f32 %v2210, %v2306
        %v2342 = vadd.f32 %v2213, %v2306
        %v2343 = vadd.f32 %v2216, %v2306
        %v2344 = vadd.f32 %v2219, %v2306
        %v2345 = vadd.f32 %v2222, %v2306
        %v2346 = vadd.f32 %v2225, %v2306
        %v2347 = vadd.f32 %v2228, %v2306
        %v2348 = vadd.f32 %v2231, %v2306
        %v2349 = vadd.f32 %v2234, %v2306
        %v2350 = vadd.f32 %v2237, %v2306
        %v2351 = vadd.f32 %v2240, %v2306
        %v2352 = vadd.f32 %v2243, %v2306
        %v2353 = vadd.f32 %v2246, %v2306
        %v2354 = vadd.f32 %v2249, %v2306
        %v2355 = vadd.f32 %v2252, %v2306
        %v2356 = vadd.f32 %v2255, %v2306
        %v2357 = vadd.f32 %v2258, %v2306
        %v2358 = vadd.f32 %v2261, %v2306
        %v2359 = vadd.f32 %v2264, %v2306
        %v2360 = vadd.f32 %v2267, %v2306
        %v2361 = vadd.f32 %v2270, %v2306
        %v2362 = vadd.f32 %v2273, %v2306
        %v2363 = vadd.f32 %v2276, %v2306
        %v2364 = vadd.f32 %v2279, %v2306
        %v2365 = vadd.f32 %v2282, %v2306
        %v2366 = vadd.f32 %v2285, %v2306
        %v2367 = vadd.f32 %v2288, %v2306
        %v2368 = vadd.f32 %v2291, %v2306
        %v2369 = vadd.f32 %v2294, %v2306
        %v2370 = vadd.f32 %v2297, %v2306
        %v2371 = vadd.f32 %v2300, %v2306
        %vm2372 = vcmask 7168
        %2373 = vst.msk [vmem:[%s331] sm:$0xff] %vm2372, %v2308
        %2374 = vst.msk [vmem:[%s331 + $0x8] sm:$0xff] %vm2372, %v2309
        %2375 = vst.msk [vmem:[%s331 + $0x10] sm:$0xff] %vm2372, %v2310
        %2376 = vst.msk [vmem:[%s331 + $0x18] sm:$0xff] %vm2372, %v2311
        %2377 = vst.msk [vmem:[%s331 + $0x20] sm:$0xff] %vm2372, %v2312
        %2378 = vst.msk [vmem:[%s331 + $0x28] sm:$0xff] %vm2372, %v2313
        %2379 = vst.msk [vmem:[%s331 + $0x30] sm:$0xff] %vm2372, %v2314
        %2380 = vst.msk [vmem:[%s331 + $0x38] sm:$0xff] %vm2372, %v2315
        %2381 = vst.msk [vmem:[%s331 + $0x40] sm:$0xff] %vm2372, %v2316
        %2382 = vst.msk [vmem:[%s331 + $0x48] sm:$0xff] %vm2372, %v2317
        %2383 = vst.msk [vmem:[%s331 + $0x50] sm:$0xff] %vm2372, %v2318
        %2384 = vst.msk [vmem:[%s331 + $0x58] sm:$0xff] %vm2372, %v2319
        %2385 = vst.msk [vmem:[%s331 + $0x60] sm:$0xff] %vm2372, %v2320
        %2386 = vst.msk [vmem:[%s331 + $0x68] sm:$0xff] %vm2372, %v2321
        %2387 = vst.msk [vmem:[%s331 + $0x70] sm:$0xff] %vm2372, %v2322
        %2388 = vst.msk [vmem:[%s331 + $0x78] sm:$0xff] %vm2372, %v2323
        %2389 = vst.msk [vmem:[%s331 + $0x80] sm:$0xff] %vm2372, %v2324
        %2390 = vst.msk [vmem:[%s331 + $0x88] sm:$0xff] %vm2372, %v2325
        %2391 = vst.msk [vmem:[%s331 + $0x90] sm:$0xff] %vm2372, %v2326
        %2392 = vst.msk [vmem:[%s331 + $0x98] sm:$0xff] %vm2372, %v2327
        %2393 = vst.msk [vmem:[%s331 + $0xa0] sm:$0xff] %vm2372, %v2328
        %2394 = vst.msk [vmem:[%s331 + $0xa8] sm:$0xff] %vm2372, %v2329
        %2395 = vst.msk [vmem:[%s331 + $0xb0] sm:$0xff] %vm2372, %v2330
        %2396 = vst.msk [vmem:[%s331 + $0xb8] sm:$0xff] %vm2372, %v2331
        %2397 = vst.msk [vmem:[%s331 + $0xc0] sm:$0xff] %vm2372, %v2332
        %2398 = vst.msk [vmem:[%s331 + $0xc8] sm:$0xff] %vm2372, %v2333
        %2399 = vst.msk [vmem:[%s331 + $0xd0] sm:$0xff] %vm2372, %v2334
        %2400 = vst.msk [vmem:[%s331 + $0xd8] sm:$0xff] %vm2372, %v2335
        %2401 = vst.msk [vmem:[%s331 + $0xe0] sm:$0xff] %vm2372, %v2336
        %2402 = vst.msk [vmem:[%s331 + $0xe8] sm:$0xff] %vm2372, %v2337
        %2403 = vst.msk [vmem:[%s331 + $0xf0] sm:$0xff] %vm2372, %v2338
        %2404 = vst.msk [vmem:[%s331 + $0xf8] sm:$0xff] %vm2372, %v2339
        %2405 = vst.msk [vmem:[%s331 + $0x100] sm:$0xff] %vm2372, %v2340
        %2406 = vst.msk [vmem:[%s331 + $0x108] sm:$0xff] %vm2372, %v2341
        %2407 = vst.msk [vmem:[%s331 + $0x110] sm:$0xff] %vm2372, %v2342
        %2408 = vst.msk [vmem:[%s331 + $0x118] sm:$0xff] %vm2372, %v2343
        %2409 = vst.msk [vmem:[%s331 + $0x120] sm:$0xff] %vm2372, %v2344
        %2410 = vst.msk [vmem:[%s331 + $0x128] sm:$0xff] %vm2372, %v2345
        %2411 = vst.msk [vmem:[%s331 + $0x130] sm:$0xff] %vm2372, %v2346
        %2412 = vst.msk [vmem:[%s331 + $0x138] sm:$0xff] %vm2372, %v2347
        %2413 = vst.msk [vmem:[%s331 + $0x140] sm:$0xff] %vm2372, %v2348
        %2414 = vst.msk [vmem:[%s331 + $0x148] sm:$0xff] %vm2372, %v2349
        %2415 = vst.msk [vmem:[%s331 + $0x150] sm:$0xff] %vm2372, %v2350
        %2416 = vst.msk [vmem:[%s331 + $0x158] sm:$0xff] %vm2372, %v2351
        %2417 = vst.msk [vmem:[%s331 + $0x160] sm:$0xff] %vm2372, %v2352
        %2418 = vst.msk [vmem:[%s331 + $0x168] sm:$0xff] %vm2372, %v2353
        %2419 = vst.msk [vmem:[%s331 + $0x170] sm:$0xff] %vm2372, %v2354
        %2420 = vst.msk [vmem:[%s331 + $0x178] sm:$0xff] %vm2372, %v2355
        %2421 = vst.msk [vmem:[%s331 + $0x180] sm:$0xff] %vm2372, %v2356
        %2422 = vst.msk [vmem:[%s331 + $0x188] sm:$0xff] %vm2372, %v2357
        %2423 = vst.msk [vmem:[%s331 + $0x190] sm:$0xff] %vm2372, %v2358
        %2424 = vst.msk [vmem:[%s331 + $0x198] sm:$0xff] %vm2372, %v2359
        %2425 = vst.msk [vmem:[%s331 + $0x1a0] sm:$0xff] %vm2372, %v2360
        %2426 = vst.msk [vmem:[%s331 + $0x1a8] sm:$0xff] %vm2372, %v2361
        %2427 = vst.msk [vmem:[%s331 + $0x1b0] sm:$0xff] %vm2372, %v2362
        %2428 = vst.msk [vmem:[%s331 + $0x1b8] sm:$0xff] %vm2372, %v2363
        %2429 = vst.msk [vmem:[%s331 + $0x1c0] sm:$0xff] %vm2372, %v2364
        %2430 = vst.msk [vmem:[%s331 + $0x1c8] sm:$0xff] %vm2372, %v2365
        %2431 = vst.msk [vmem:[%s331 + $0x1d0] sm:$0xff] %vm2372, %v2366
        %2432 = vst.msk [vmem:[%s331 + $0x1d8] sm:$0xff] %vm2372, %v2367
        %2433 = vst.msk [vmem:[%s331 + $0x1e0] sm:$0xff] %vm2372, %v2368
        %2434 = vst.msk [vmem:[%s331 + $0x1e8] sm:$0xff] %vm2372, %v2369
        %2435 = vst.msk [vmem:[%s331 + $0x1f0] sm:$0xff] %vm2372, %v2370
        %2436 = vst.msk [vmem:[%s331 + $0x1f8] sm:$0xff] %vm2372, %v2371
        %s2437 = sand.u32 %s184, 1
        %s2438 = sand.u32 %s184, 1
        %s2439 = smul.addr %s2438, 512
        %s2440 = scalar_lea.vmem [#allocation8], %s2439
        // Predicated region
        $region61: #{tpu_custom_call.1} parent=47 // pred_check
          %p2441 = pneg %p194
        $region62: #{tpu_custom_call.1} parent=47 // pred_check_branch
          %2443 = sbr.rel (%p2441) target = $region64
        $region63: #{tpu_custom_call.1} parent=47 // pred_region
          %s2444 = smul.u32 64, %s24
          %s2445 = ssub.s32 65, %s2444
          %p2446 = scmp.lt.s32.totalorder %s2445, 64
          %s2447 = scalar_select %p2446, %s2445, 64
          %s2448 = smul.u32 128, %s2447
          %p2449 = scmp.ne.s32.totalorder 0, %s2448
          %s2450 = smul.addr %s2444, 8
          %s2451 = scalar_lea.vmem %s7, %s2450
          // Predicated region
          $region65: #{tpu_custom_call.1} parent=63 // pred_check
            %p2452 = pneg %p2449
          $region66: #{tpu_custom_call.1} parent=63 // pred_check_branch
            %2454 = sbr.rel (%p2452) target = $region68
          $region67: #{tpu_custom_call.1} parent=63 // pred_region
            // Predicated region
            $region69: #{tpu_custom_call.1} parent=67 // pred_check
              _
            $region70: #{tpu_custom_call.1} parent=67 // pred_check_branch
              %2456 = sbr.rel (0) target = $region72
            $region71: #{tpu_custom_call.1} parent=67 // pred_region
              // Predicated region
              $region91: #{tpu_custom_call.1} parent=71 // pred_check
                _
              $region92: #{tpu_custom_call.1} parent=71 // pred_check_branch
                %2632 = sbr.rel (0) target = $region94
              $region93: #{tpu_custom_call.1} parent=71 // pred_region
                %s2633 = sshrl.u32 %s2447, 6
                // While loop
                $region95: #{tpu_custom_call.1} parent=93 // loop_pre_header
                  _
                $region96: #{tpu_custom_call.1} parent=93 // loop_header
                  %s2635 = sphi 0, %s2637
                  %p2636 = scmp.ge.s32.totalorder %s2635, %s2633
                  %s2640 = sphi 0, %s2773
                  %s2641 = sphi %s2440, %s2776
                  %s2642 = sphi %s2451, %s2777
                $region97: #{tpu_custom_call.1} parent=93 // loop_header_branch
                  %2639 = sbr.rel (%p2636) target = $region101
                $region98: #{tpu_custom_call.1} parent=93 // loop_body
                  %v2643 = vld [vmem:[%s2641] sm:$0xff]
                  %2644 = vst [vmem:[%s2642] sm:$0xff] %v2643
                  %v2645 = vld [vmem:[%s2641 + $0x8] sm:$0xff]
                  %2646 = vst [vmem:[%s2642 + $0x8] sm:$0xff] %v2645
                  %v2647 = vld [vmem:[%s2641 + $0x10] sm:$0xff]
                  %2648 = vst [vmem:[%s2642 + $0x10] sm:$0xff] %v2647
                  %v2649 = vld [vmem:[%s2641 + $0x18] sm:$0xff]
                  %2650 = vst [vmem:[%s2642 + $0x18] sm:$0xff] %v2649
                  %v2651 = vld [vmem:[%s2641 + $0x20] sm:$0xff]
                  %2652 = vst [vmem:[%s2642 + $0x20] sm:$0xff] %v2651
                  %v2653 = vld [vmem:[%s2641 + $0x28] sm:$0xff]
                  %2654 = vst [vmem:[%s2642 + $0x28] sm:$0xff] %v2653
                  %v2655 = vld [vmem:[%s2641 + $0x30] sm:$0xff]
                  %2656 = vst [vmem:[%s2642 + $0x30] sm:$0xff] %v2655
                  %v2657 = vld [vmem:[%s2641 + $0x38] sm:$0xff]
                  %2658 = vst [vmem:[%s2642 + $0x38] sm:$0xff] %v2657
                  %v2659 = vld [vmem:[%s2641 + $0x40] sm:$0xff]
                  %2660 = vst [vmem:[%s2642 + $0x40] sm:$0xff] %v2659
                  %v2661 = vld [vmem:[%s2641 + $0x48] sm:$0xff]
                  %2662 = vst [vmem:[%s2642 + $0x48] sm:$0xff] %v2661
                  %v2663 = vld [vmem:[%s2641 + $0x50] sm:$0xff]
                  %2664 = vst [vmem:[%s2642 + $0x50] sm:$0xff] %v2663
                  %v2665 = vld [vmem:[%s2641 + $0x58] sm:$0xff]
                  %2666 = vst [vmem:[%s2642 + $0x58] sm:$0xff] %v2665
                  %v2667 = vld [vmem:[%s2641 + $0x60] sm:$0xff]
                  %2668 = vst [vmem:[%s2642 + $0x60] sm:$0xff] %v2667
                  %v2669 = vld [vmem:[%s2641 + $0x68] sm:$0xff]
                  %2670 = vst [vmem:[%s2642 + $0x68] sm:$0xff] %v2669
                  %v2671 = vld [vmem:[%s2641 + $0x70] sm:$0xff]
                  %2672 = vst [vmem:[%s2642 + $0x70] sm:$0xff] %v2671
                  %v2673 = vld [vmem:[%s2641 + $0x78] sm:$0xff]
                  %2674 = vst [vmem:[%s2642 + $0x78] sm:$0xff] %v2673
                  %v2675 = vld [vmem:[%s2641 + $0x80] sm:$0xff]
                  %2676 = vst [vmem:[%s2642 + $0x80] sm:$0xff] %v2675
                  %v2677 = vld [vmem:[%s2641 + $0x88] sm:$0xff]
                  %2678 = vst [vmem:[%s2642 + $0x88] sm:$0xff] %v2677
                  %v2679 = vld [vmem:[%s2641 + $0x90] sm:$0xff]
                  %2680 = vst [vmem:[%s2642 + $0x90] sm:$0xff] %v2679
                  %v2681 = vld [vmem:[%s2641 + $0x98] sm:$0xff]
                  %2682 = vst [vmem:[%s2642 + $0x98] sm:$0xff] %v2681
                  %v2683 = vld [vmem:[%s2641 + $0xa0] sm:$0xff]
                  %2684 = vst [vmem:[%s2642 + $0xa0] sm:$0xff] %v2683
                  %v2685 = vld [vmem:[%s2641 + $0xa8] sm:$0xff]
                  %2686 = vst [vmem:[%s2642 + $0xa8] sm:$0xff] %v2685
                  %v2687 = vld [vmem:[%s2641 + $0xb0] sm:$0xff]
                  %2688 = vst [vmem:[%s2642 + $0xb0] sm:$0xff] %v2687
                  %v2689 = vld [vmem:[%s2641 + $0xb8] sm:$0xff]
                  %2690 = vst [vmem:[%s2642 + $0xb8] sm:$0xff] %v2689
                  %v2691 = vld [vmem:[%s2641 + $0xc0] sm:$0xff]
                  %2692 = vst [vmem:[%s2642 + $0xc0] sm:$0xff] %v2691
                  %v2693 = vld [vmem:[%s2641 + $0xc8] sm:$0xff]
                  %2694 = vst [vmem:[%s2642 + $0xc8] sm:$0xff] %v2693
                  %v2695 = vld [vmem:[%s2641 + $0xd0] sm:$0xff]
                  %2696 = vst [vmem:[%s2642 + $0xd0] sm:$0xff] %v2695
                  %v2697 = vld [vmem:[%s2641 + $0xd8] sm:$0xff]
                  %2698 = vst [vmem:[%s2642 + $0xd8] sm:$0xff] %v2697
                  %v2699 = vld [vmem:[%s2641 + $0xe0] sm:$0xff]
                  %2700 = vst [vmem:[%s2642 + $0xe0] sm:$0xff] %v2699
                  %v2701 = vld [vmem:[%s2641 + $0xe8] sm:$0xff]
                  %2702 = vst [vmem:[%s2642 + $0xe8] sm:$0xff] %v2701
                  %v2703 = vld [vmem:[%s2641 + $0xf0] sm:$0xff]
                  %2704 = vst [vmem:[%s2642 + $0xf0] sm:$0xff] %v2703
                  %v2705 = vld [vmem:[%s2641 + $0xf8] sm:$0xff]
                  %2706 = vst [vmem:[%s2642 + $0xf8] sm:$0xff] %v2705
                  %v2707 = vld [vmem:[%s2641 + $0x100] sm:$0xff]
                  %2708 = vst [vmem:[%s2642 + $0x100] sm:$0xff] %v2707
                  %v2709 = vld [vmem:[%s2641 + $0x108] sm:$0xff]
                  %2710 = vst [vmem:[%s2642 + $0x108] sm:$0xff] %v2709
                  %v2711 = vld [vmem:[%s2641 + $0x110] sm:$0xff]
                  %2712 = vst [vmem:[%s2642 + $0x110] sm:$0xff] %v2711
                  %v2713 = vld [vmem:[%s2641 + $0x118] sm:$0xff]
                  %2714 = vst [vmem:[%s2642 + $0x118] sm:$0xff] %v2713
                  %v2715 = vld [vmem:[%s2641 + $0x120] sm:$0xff]
                  %2716 = vst [vmem:[%s2642 + $0x120] sm:$0xff] %v2715
                  %v2717 = vld [vmem:[%s2641 + $0x128] sm:$0xff]
                  %2718 = vst [vmem:[%s2642 + $0x128] sm:$0xff] %v2717
                  %v2719 = vld [vmem:[%s2641 + $0x130] sm:$0xff]
                  %2720 = vst [vmem:[%s2642 + $0x130] sm:$0xff] %v2719
                  %v2721 = vld [vmem:[%s2641 + $0x138] sm:$0xff]
                  %2722 = vst [vmem:[%s2642 + $0x138] sm:$0xff] %v2721
                  %v2723 = vld [vmem:[%s2641 + $0x140] sm:$0xff]
                  %2724 = vst [vmem:[%s2642 + $0x140] sm:$0xff] %v2723
                  %v2725 = vld [vmem:[%s2641 + $0x148] sm:$0xff]
                  %2726 = vst [vmem:[%s2642 + $0x148] sm:$0xff] %v2725
                  %v2727 = vld [vmem:[%s2641 + $0x150] sm:$0xff]
                  %2728 = vst [vmem:[%s2642 + $0x150] sm:$0xff] %v2727
                  %v2729 = vld [vmem:[%s2641 + $0x158] sm:$0xff]
                  %2730 = vst [vmem:[%s2642 + $0x158] sm:$0xff] %v2729
                  %v2731 = vld [vmem:[%s2641 + $0x160] sm:$0xff]
                  %2732 = vst [vmem:[%s2642 + $0x160] sm:$0xff] %v2731
                  %v2733 = vld [vmem:[%s2641 + $0x168] sm:$0xff]
                  %2734 = vst [vmem:[%s2642 + $0x168] sm:$0xff] %v2733
                  %v2735 = vld [vmem:[%s2641 + $0x170] sm:$0xff]
                  %2736 = vst [vmem:[%s2642 + $0x170] sm:$0xff] %v2735
                  %v2737 = vld [vmem:[%s2641 + $0x178] sm:$0xff]
                  %2738 = vst [vmem:[%s2642 + $0x178] sm:$0xff] %v2737
                  %v2739 = vld [vmem:[%s2641 + $0x180] sm:$0xff]
                  %2740 = vst [vmem:[%s2642 + $0x180] sm:$0xff] %v2739
                  %v2741 = vld [vmem:[%s2641 + $0x188] sm:$0xff]
                  %2742 = vst [vmem:[%s2642 + $0x188] sm:$0xff] %v2741
                  %v2743 = vld [vmem:[%s2641 + $0x190] sm:$0xff]
                  %2744 = vst [vmem:[%s2642 + $0x190] sm:$0xff] %v2743
                  %v2745 = vld [vmem:[%s2641 + $0x198] sm:$0xff]
                  %2746 = vst [vmem:[%s2642 + $0x198] sm:$0xff] %v2745
                  %v2747 = vld [vmem:[%s2641 + $0x1a0] sm:$0xff]
                  %2748 = vst [vmem:[%s2642 + $0x1a0] sm:$0xff] %v2747
                  %v2749 = vld [vmem:[%s2641 + $0x1a8] sm:$0xff]
                  %2750 = vst [vmem:[%s2642 + $0x1a8] sm:$0xff] %v2749
                  %v2751 = vld [vmem:[%s2641 + $0x1b0] sm:$0xff]
                  %2752 = vst [vmem:[%s2642 + $0x1b0] sm:$0xff] %v2751
                  %v2753 = vld [vmem:[%s2641 + $0x1b8] sm:$0xff]
                  %2754 = vst [vmem:[%s2642 + $0x1b8] sm:$0xff] %v2753
                  %v2755 = vld [vmem:[%s2641 + $0x1c0] sm:$0xff]
                  %2756 = vst [vmem:[%s2642 + $0x1c0] sm:$0xff] %v2755
                  %v2757 = vld [vmem:[%s2641 + $0x1c8] sm:$0xff]
                  %2758 = vst [vmem:[%s2642 + $0x1c8] sm:$0xff] %v2757
                  %v2759 = vld [vmem:[%s2641 + $0x1d0] sm:$0xff]
                  %2760 = vst [vmem:[%s2642 + $0x1d0] sm:$0xff] %v2759
                  %v2761 = vld [vmem:[%s2641 + $0x1d8] sm:$0xff]
                  %2762 = vst [vmem:[%s2642 + $0x1d8] sm:$0xff] %v2761
                  %v2763 = vld [vmem:[%s2641 + $0x1e0] sm:$0xff]
                  %2764 = vst [vmem:[%s2642 + $0x1e0] sm:$0xff] %v2763
                  %v2765 = vld [vmem:[%s2641 + $0x1e8] sm:$0xff]
                  %2766 = vst [vmem:[%s2642 + $0x1e8] sm:$0xff] %v2765
                  %v2767 = vld [vmem:[%s2641 + $0x1f0] sm:$0xff]
                  %2768 = vst [vmem:[%s2642 + $0x1f0] sm:$0xff] %v2767
                  %v2769 = vld [vmem:[%s2641 + $0x1f8] sm:$0xff]
                  %2770 = vst [vmem:[%s2642 + $0x1f8] sm:$0xff] %v2769
                  %s2771 = sadd.s32 1, %s2640
                  %p2772 = scmp.ge.s32.totalorder %s2771, %s2633
                  %s2773 = scalar_select %p2772, 0, %s2771
                  %s2774 = smul.u32 %s2773, 512
                  %s2775 = smul.u32 %s2773, 512
                  %s2776 = scalar_lea.vmem %s2440, %s2774 [#allocation8]
                  %s2777 = scalar_lea.vmem %s2451, %s2775
                $region99: #{tpu_custom_call.1} parent=93 // loop_footer
                  %s2637 = sadd.s32 %s2635, 1
                $region100: #{tpu_custom_call.1} parent=93 // loop_footer_branch
                  %2634 = sbr.rel target = $region96
                $region101: #{tpu_custom_call.1} parent=93 // loop_exit
                  _
                %s2778 = sshrl.u32 %s2447, 6
                %s2779 = sand.u32 %s2447, 63
                %s2780 = smul.u32 %s2778, 64
                %s2781 = smul.u32 8, %s2780
                %s2782 = scalar_lea.vmem %s2440, %s2781 [#allocation8]
                %s2783 = smul.u32 8, %s2780
                %s2784 = scalar_lea.vmem %s2451, %s2783
                // While loop
                $region102: #{tpu_custom_call.1} parent=93 // loop_pre_header
                  _
                $region103: #{tpu_custom_call.1} parent=93 // loop_header
                  %s2786 = sphi 0, %s2788
                  %p2787 = scmp.ge.s32.totalorder %s2786, %s2779
                  %s2791 = sphi 0, %s2798
                  %s2792 = sphi %s2782, %s2801
                  %s2793 = sphi %s2784, %s2802
                $region104: #{tpu_custom_call.1} parent=93 // loop_header_branch
                  %2790 = sbr.rel (%p2787) target = $region108
                $region105: #{tpu_custom_call.1} parent=93 // loop_body
                  %v2794 = vld [vmem:[%s2792] sm:$0xff]
                  %2795 = vst [vmem:[%s2793] sm:$0xff] %v2794
                  %s2796 = sadd.s32 1, %s2791
                  %p2797 = scmp.ge.s32.totalorder %s2796, %s2779
                  %s2798 = scalar_select %p2797, 0, %s2796
                  %s2799 = smul.u32 %s2798, 8
                  %s2800 = smul.u32 %s2798, 8
                  %s2801 = scalar_lea.vmem %s2782, %s2799 [#allocation8]
                  %s2802 = scalar_lea.vmem %s2784, %s2800
                $region106: #{tpu_custom_call.1} parent=93 // loop_footer
                  %s2788 = sadd.s32 %s2786, 1
                $region107: #{tpu_custom_call.1} parent=93 // loop_footer_branch
                  %2785 = sbr.rel target = $region103
                $region108: #{tpu_custom_call.1} parent=93 // loop_exit
                  _
              $region94: #{tpu_custom_call.1} parent=71 // pred_fallthru
                _
              // Predicated region
              $region109: #{tpu_custom_call.1} parent=71 // pred_check
                _
              $region110: #{tpu_custom_call.1} parent=71 // pred_check_branch
                %2804 = sbr.rel target = $region112
              $region111: #{tpu_custom_call.1} parent=71 // pred_region
                _
              $region112: #{tpu_custom_call.1} parent=71 // pred_fallthru
                _
            $region72: #{tpu_custom_call.1} parent=67 // pred_fallthru
              _
            // Predicated region
            $region73: #{tpu_custom_call.1} parent=67 // pred_check
              _
            $region74: #{tpu_custom_call.1} parent=67 // pred_check_branch
              %2458 = sbr.rel target = $region76
            $region75: #{tpu_custom_call.1} parent=67 // pred_region
              %s2460 = ssub.s32 256, 1
              %s2461 = sshrl.u32 %s2447, 6
              // While loop
              $region77: #{tpu_custom_call.1} parent=75 // loop_pre_header
                _
              $region78: #{tpu_custom_call.1} parent=75 // loop_header
                %s2463 = sphi 0, %s2465
                %p2464 = scmp.ge.s32.totalorder %s2463, %s2461
                %s2468 = sphi 0, %s2601
                %s2469 = sphi %s2440, %s2604
                %s2470 = sphi %s2451, %s2605
              $region79: #{tpu_custom_call.1} parent=75 // loop_header_branch
                %2467 = sbr.rel (%p2464) target = $region83
              $region80: #{tpu_custom_call.1} parent=75 // loop_body
                %v2471 = vld [vmem:[%s2469] sm:%s2460]
                %2472 = vst [vmem:[%s2470] sm:%s2460] %v2471
                %v2473 = vld [vmem:[%s2469 + $0x8] sm:%s2460]
                %2474 = vst [vmem:[%s2470 + $0x8] sm:%s2460] %v2473
                %v2475 = vld [vmem:[%s2469 + $0x10] sm:%s2460]
                %2476 = vst [vmem:[%s2470 + $0x10] sm:%s2460] %v2475
                %v2477 = vld [vmem:[%s2469 + $0x18] sm:%s2460]
                %2478 = vst [vmem:[%s2470 + $0x18] sm:%s2460] %v2477
                %v2479 = vld [vmem:[%s2469 + $0x20] sm:%s2460]
                %2480 = vst [vmem:[%s2470 + $0x20] sm:%s2460] %v2479
                %v2481 = vld [vmem:[%s2469 + $0x28] sm:%s2460]
                %2482 = vst [vmem:[%s2470 + $0x28] sm:%s2460] %v2481
                %v2483 = vld [vmem:[%s2469 + $0x30] sm:%s2460]
                %2484 = vst [vmem:[%s2470 + $0x30] sm:%s2460] %v2483
                %v2485 = vld [vmem:[%s2469 + $0x38] sm:%s2460]
                %2486 = vst [vmem:[%s2470 + $0x38] sm:%s2460] %v2485
                %v2487 = vld [vmem:[%s2469 + $0x40] sm:%s2460]
                %2488 = vst [vmem:[%s2470 + $0x40] sm:%s2460] %v2487
                %v2489 = vld [vmem:[%s2469 + $0x48] sm:%s2460]
                %2490 = vst [vmem:[%s2470 + $0x48] sm:%s2460] %v2489
                %v2491 = vld [vmem:[%s2469 + $0x50] sm:%s2460]
                %2492 = vst [vmem:[%s2470 + $0x50] sm:%s2460] %v2491
                %v2493 = vld [vmem:[%s2469 + $0x58] sm:%s2460]
                %2494 = vst [vmem:[%s2470 + $0x58] sm:%s2460] %v2493
                %v2495 = vld [vmem:[%s2469 + $0x60] sm:%s2460]
                %2496 = vst [vmem:[%s2470 + $0x60] sm:%s2460] %v2495
                %v2497 = vld [vmem:[%s2469 + $0x68] sm:%s2460]
                %2498 = vst [vmem:[%s2470 + $0x68] sm:%s2460] %v2497
                %v2499 = vld [vmem:[%s2469 + $0x70] sm:%s2460]
                %2500 = vst [vmem:[%s2470 + $0x70] sm:%s2460] %v2499
                %v2501 = vld [vmem:[%s2469 + $0x78] sm:%s2460]
                %2502 = vst [vmem:[%s2470 + $0x78] sm:%s2460] %v2501
                %v2503 = vld [vmem:[%s2469 + $0x80] sm:%s2460]
                %2504 = vst [vmem:[%s2470 + $0x80] sm:%s2460] %v2503
                %v2505 = vld [vmem:[%s2469 + $0x88] sm:%s2460]
                %2506 = vst [vmem:[%s2470 + $0x88] sm:%s2460] %v2505
                %v2507 = vld [vmem:[%s2469 + $0x90] sm:%s2460]
                %2508 = vst [vmem:[%s2470 + $0x90] sm:%s2460] %v2507
                %v2509 = vld [vmem:[%s2469 + $0x98] sm:%s2460]
                %2510 = vst [vmem:[%s2470 + $0x98] sm:%s2460] %v2509
                %v2511 = vld [vmem:[%s2469 + $0xa0] sm:%s2460]
                %2512 = vst [vmem:[%s2470 + $0xa0] sm:%s2460] %v2511
                %v2513 = vld [vmem:[%s2469 + $0xa8] sm:%s2460]
                %2514 = vst [vmem:[%s2470 + $0xa8] sm:%s2460] %v2513
                %v2515 = vld [vmem:[%s2469 + $0xb0] sm:%s2460]
                %2516 = vst [vmem:[%s2470 + $0xb0] sm:%s2460] %v2515
                %v2517 = vld [vmem:[%s2469 + $0xb8] sm:%s2460]
                %2518 = vst [vmem:[%s2470 + $0xb8] sm:%s2460] %v2517
                %v2519 = vld [vmem:[%s2469 + $0xc0] sm:%s2460]
                %2520 = vst [vmem:[%s2470 + $0xc0] sm:%s2460] %v2519
                %v2521 = vld [vmem:[%s2469 + $0xc8] sm:%s2460]
                %2522 = vst [vmem:[%s2470 + $0xc8] sm:%s2460] %v2521
                %v2523 = vld [vmem:[%s2469 + $0xd0] sm:%s2460]
                %2524 = vst [vmem:[%s2470 + $0xd0] sm:%s2460] %v2523
                %v2525 = vld [vmem:[%s2469 + $0xd8] sm:%s2460]
                %2526 = vst [vmem:[%s2470 + $0xd8] sm:%s2460] %v2525
                %v2527 = vld [vmem:[%s2469 + $0xe0] sm:%s2460]
                %2528 = vst [vmem:[%s2470 + $0xe0] sm:%s2460] %v2527
                %v2529 = vld [vmem:[%s2469 + $0xe8] sm:%s2460]
                %2530 = vst [vmem:[%s2470 + $0xe8] sm:%s2460] %v2529
                %v2531 = vld [vmem:[%s2469 + $0xf0] sm:%s2460]
                %2532 = vst [vmem:[%s2470 + $0xf0] sm:%s2460] %v2531
                %v2533 = vld [vmem:[%s2469 + $0xf8] sm:%s2460]
                %2534 = vst [vmem:[%s2470 + $0xf8] sm:%s2460] %v2533
                %v2535 = vld [vmem:[%s2469 + $0x100] sm:%s2460]
                %2536 = vst [vmem:[%s2470 + $0x100] sm:%s2460] %v2535
                %v2537 = vld [vmem:[%s2469 + $0x108] sm:%s2460]
                %2538 = vst [vmem:[%s2470 + $0x108] sm:%s2460] %v2537
                %v2539 = vld [vmem:[%s2469 + $0x110] sm:%s2460]
                %2540 = vst [vmem:[%s2470 + $0x110] sm:%s2460] %v2539
                %v2541 = vld [vmem:[%s2469 + $0x118] sm:%s2460]
                %2542 = vst [vmem:[%s2470 + $0x118] sm:%s2460] %v2541
                %v2543 = vld [vmem:[%s2469 + $0x120] sm:%s2460]
                %2544 = vst [vmem:[%s2470 + $0x120] sm:%s2460] %v2543
                %v2545 = vld [vmem:[%s2469 + $0x128] sm:%s2460]
                %2546 = vst [vmem:[%s2470 + $0x128] sm:%s2460] %v2545
                %v2547 = vld [vmem:[%s2469 + $0x130] sm:%s2460]
                %2548 = vst [vmem:[%s2470 + $0x130] sm:%s2460] %v2547
                %v2549 = vld [vmem:[%s2469 + $0x138] sm:%s2460]
                %2550 = vst [vmem:[%s2470 + $0x138] sm:%s2460] %v2549
                %v2551 = vld [vmem:[%s2469 + $0x140] sm:%s2460]
                %2552 = vst [vmem:[%s2470 + $0x140] sm:%s2460] %v2551
                %v2553 = vld [vmem:[%s2469 + $0x148] sm:%s2460]
                %2554 = vst [vmem:[%s2470 + $0x148] sm:%s2460] %v2553
                %v2555 = vld [vmem:[%s2469 + $0x150] sm:%s2460]
                %2556 = vst [vmem:[%s2470 + $0x150] sm:%s2460] %v2555
                %v2557 = vld [vmem:[%s2469 + $0x158] sm:%s2460]
                %2558 = vst [vmem:[%s2470 + $0x158] sm:%s2460] %v2557
                %v2559 = vld [vmem:[%s2469 + $0x160] sm:%s2460]
                %2560 = vst [vmem:[%s2470 + $0x160] sm:%s2460] %v2559
                %v2561 = vld [vmem:[%s2469 + $0x168] sm:%s2460]
                %2562 = vst [vmem:[%s2470 + $0x168] sm:%s2460] %v2561
                %v2563 = vld [vmem:[%s2469 + $0x170] sm:%s2460]
                %2564 = vst [vmem:[%s2470 + $0x170] sm:%s2460] %v2563
                %v2565 = vld [vmem:[%s2469 + $0x178] sm:%s2460]
                %2566 = vst [vmem:[%s2470 + $0x178] sm:%s2460] %v2565
                %v2567 = vld [vmem:[%s2469 + $0x180] sm:%s2460]
                %2568 = vst [vmem:[%s2470 + $0x180] sm:%s2460] %v2567
                %v2569 = vld [vmem:[%s2469 + $0x188] sm:%s2460]
                %2570 = vst [vmem:[%s2470 + $0x188] sm:%s2460] %v2569
                %v2571 = vld [vmem:[%s2469 + $0x190] sm:%s2460]
                %2572 = vst [vmem:[%s2470 + $0x190] sm:%s2460] %v2571
                %v2573 = vld [vmem:[%s2469 + $0x198] sm:%s2460]
                %2574 = vst [vmem:[%s2470 + $0x198] sm:%s2460] %v2573
                %v2575 = vld [vmem:[%s2469 + $0x1a0] sm:%s2460]
                %2576 = vst [vmem:[%s2470 + $0x1a0] sm:%s2460] %v2575
                %v2577 = vld [vmem:[%s2469 + $0x1a8] sm:%s2460]
                %2578 = vst [vmem:[%s2470 + $0x1a8] sm:%s2460] %v2577
                %v2579 = vld [vmem:[%s2469 + $0x1b0] sm:%s2460]
                %2580 = vst [vmem:[%s2470 + $0x1b0] sm:%s2460] %v2579
                %v2581 = vld [vmem:[%s2469 + $0x1b8] sm:%s2460]
                %2582 = vst [vmem:[%s2470 + $0x1b8] sm:%s2460] %v2581
                %v2583 = vld [vmem:[%s2469 + $0x1c0] sm:%s2460]
                %2584 = vst [vmem:[%s2470 + $0x1c0] sm:%s2460] %v2583
                %v2585 = vld [vmem:[%s2469 + $0x1c8] sm:%s2460]
                %2586 = vst [vmem:[%s2470 + $0x1c8] sm:%s2460] %v2585
                %v2587 = vld [vmem:[%s2469 + $0x1d0] sm:%s2460]
                %2588 = vst [vmem:[%s2470 + $0x1d0] sm:%s2460] %v2587
                %v2589 = vld [vmem:[%s2469 + $0x1d8] sm:%s2460]
                %2590 = vst [vmem:[%s2470 + $0x1d8] sm:%s2460] %v2589
                %v2591 = vld [vmem:[%s2469 + $0x1e0] sm:%s2460]
                %2592 = vst [vmem:[%s2470 + $0x1e0] sm:%s2460] %v2591
                %v2593 = vld [vmem:[%s2469 + $0x1e8] sm:%s2460]
                %2594 = vst [vmem:[%s2470 + $0x1e8] sm:%s2460] %v2593
                %v2595 = vld [vmem:[%s2469 + $0x1f0] sm:%s2460]
                %2596 = vst [vmem:[%s2470 + $0x1f0] sm:%s2460] %v2595
                %v2597 = vld [vmem:[%s2469 + $0x1f8] sm:%s2460]
                %2598 = vst [vmem:[%s2470 + $0x1f8] sm:%s2460] %v2597
                %s2599 = sadd.s32 1, %s2468
                %p2600 = scmp.ge.s32.totalorder %s2599, %s2461
                %s2601 = scalar_select %p2600, 0, %s2599
                %s2602 = smul.u32 %s2601, 512
                %s2603 = smul.u32 %s2601, 512
                %s2604 = scalar_lea.vmem %s2440, %s2602 [#allocation8]
                %s2605 = scalar_lea.vmem %s2451, %s2603
              $region81: #{tpu_custom_call.1} parent=75 // loop_footer
                %s2465 = sadd.s32 %s2463, 1
              $region82: #{tpu_custom_call.1} parent=75 // loop_footer_branch
                %2462 = sbr.rel target = $region78
              $region83: #{tpu_custom_call.1} parent=75 // loop_exit
                _
              %s2606 = sshrl.u32 %s2447, 6
              %s2607 = sand.u32 %s2447, 63
              %s2608 = smul.u32 %s2606, 64
              %s2609 = smul.u32 8, %s2608
              %s2610 = scalar_lea.vmem %s2440, %s2609 [#allocation8]
              %s2611 = smul.u32 8, %s2608
              %s2612 = scalar_lea.vmem %s2451, %s2611
              // While loop
              $region84: #{tpu_custom_call.1} parent=75 // loop_pre_header
                _
              $region85: #{tpu_custom_call.1} parent=75 // loop_header
                %s2614 = sphi 0, %s2616
                %p2615 = scmp.ge.s32.totalorder %s2614, %s2607
                %s2619 = sphi 0, %s2626
                %s2620 = sphi %s2610, %s2629
                %s2621 = sphi %s2612, %s2630
              $region86: #{tpu_custom_call.1} parent=75 // loop_header_branch
                %2618 = sbr.rel (%p2615) target = $region90
              $region87: #{tpu_custom_call.1} parent=75 // loop_body
                %v2622 = vld [vmem:[%s2620] sm:%s2460]
                %2623 = vst [vmem:[%s2621] sm:%s2460] %v2622
                %s2624 = sadd.s32 1, %s2619
                %p2625 = scmp.ge.s32.totalorder %s2624, %s2607
                %s2626 = scalar_select %p2625, 0, %s2624
                %s2627 = smul.u32 %s2626, 8
                %s2628 = smul.u32 %s2626, 8
                %s2629 = scalar_lea.vmem %s2610, %s2627 [#allocation8]
                %s2630 = scalar_lea.vmem %s2612, %s2628
              $region88: #{tpu_custom_call.1} parent=75 // loop_footer
                %s2616 = sadd.s32 %s2614, 1
              $region89: #{tpu_custom_call.1} parent=75 // loop_footer_branch
                %2613 = sbr.rel target = $region85
              $region90: #{tpu_custom_call.1} parent=75 // loop_exit
                _
            $region76: #{tpu_custom_call.1} parent=67 // pred_fallthru
              _
          $region68: #{tpu_custom_call.1} parent=63 // pred_fallthru
            _
          %2805 = vnop
        $region64: #{tpu_custom_call.1} parent=47 // pred_fallthru
          _
      $region48: #{tpu_custom_call.1} parent=5 // pred_fallthru
        _
      %p2806 = scmp.le.s32.totalorder 2, %s19
      // Predicated region
      $region113: #{tpu_custom_call.1} parent=5 // pred_check
        %p2807 = pneg %p2806
      $region114: #{tpu_custom_call.1} parent=5 // pred_check_branch
        %2809 = sbr.rel (%p2807) target = $region116
      $region115: #{tpu_custom_call.1} parent=5 // pred_region
        %s2810 = ssub.s32 %s19, 2
        // Predicated region
        $region117: #{tpu_custom_call.1} parent=115 // pred_check
          %p2811 = pneg %p200
        $region118: #{tpu_custom_call.1} parent=115 // pred_check_branch
          %2813 = sbr.rel (%p2811) target = $region120
        $region119: #{tpu_custom_call.1} parent=115 // pred_region
          %s2814 = sand.u32 %s185, 1
          %s2815 = sand.u32 %s185, 1
          %s2816 = smul.addr %s2815, 512
          %s2817 = scalar_lea.vmem [#allocation8], %s2816
        $region120: #{tpu_custom_call.1} parent=115 // pred_fallthru
          _
      $region116: #{tpu_custom_call.1} parent=5 // pred_fallthru
        _
    $region6: #{tpu_custom_call.1} parent=1 // loop_footer
      %s23 = sadd.s32 1, %s19
    $region7: #{tpu_custom_call.1} parent=1 // loop_footer_branch
      %18 = sbr.rel target = $region3
    $region8: #{tpu_custom_call.1} parent=1 // loop_exit
      _
    %2818 = vsyncpa [#allocation4], 1
    %s2819 = scalar_lea.sflag [#allocation4], 1
    %2820 = vsyncpa %s2819, 1
    %2821 = vsyncpa [#allocation6], 1

</llo_original>
